<compile_context>
chip_gen: v5e
topology: v5e:2x2
jax: 0.10.0
libtpu: 0.0.40
codegen_flags: <defaults>
</compile_context>

<pallas_src>
import jax
import jax.numpy as jnp
from jax import lax
from jax.experimental import pallas as pl
from jax.experimental.pallas import tpu as pltpu


_EPS = 1e-30  # guards squash against |s| == 0 (reference/PyTorch would return NaN there)


def _routing_kernel(c_ref, sel_ref, u_ref, v_ref):
    # c_ref:   (IC, OC*OD)      softmax(b) expanded across output_dim (batch-invariant)
    # sel_ref: (OC*OD, OC*OD)   block-diagonal ones; (s*s) @ sel broadcasts each
    #                           capsule's squared length across its OD lanes
    # u_ref:   (BB, IC, OC*OD)  prediction vectors for this batch block (lane-dense)
    # v_ref:   (BB, OC*OD)      squashed output capsule vectors (lane-dense store)
    c = c_ref[...]
    u = u_ref[...].astype(jnp.float32)     # bf16 producers stay bf16 in HBM; upcast here

    # s = (c * u_predict).sum(dim=1): VPU gate + reduce over the input-caps axis.
    # TODO(synk): on v7x this sublane (IC-axis) reduce's XLU relayout can become
    # co-limiting once DMA drops to ~1.3us/block; an (IC, B, OC*OD) producer layout
    # would make it a pure VPU accumulation, but a wrapper-side transpose would add
    # an HBM pass, so it is only worth doing upstream of this kernel.
    s = jnp.sum(c[None, :, :] * u, axis=1)                           # (BB, OC*OD)

    # Per-capsule squared length, broadcast to every lane of its capsule (MXU,
    # exact f32 accumulation so l2 keeps full precision).
    l2 = jnp.dot(s * s, sel_ref[...],
                 preferred_element_type=jnp.float32,
                 precision=lax.Precision.HIGHEST)                    # (BB, OC*OD)

    # squash: s * l2 / (1 + l2) / sqrt(l2)  ->  EUP rsqrt + EUP approx reciprocal.
    factor = l2 * lax.rsqrt(l2 + _EPS) * pl.reciprocal(1.0 + l2, approx=True)
    v_ref[...] = (s * factor).astype(v_ref.dtype)


def agreement_routing(u_predict, b, n_iterations, *, batch_block=512):
    B, IC, OC, OD = u_predict.shape
    OCD = OC * OD
    dtype = u_predict.dtype
    itemsize = jnp.dtype(dtype).itemsize

    # Batch-invariant softmax hoisted out of the kernel, expanded to the lane-dense
    # OC*OD axis of u (tiny: IC x OCD f32).
    c = jax.nn.softmax(b.astype(jnp.float32), axis=-1)               # (IC, OC)
    c_exp = jnp.repeat(c, OD, axis=-1)                               # (IC, OC*OD)

    # Block-diagonal selector for the per-output-capsule |s|^2 reduce on the MXU.
    cap_id = jnp.arange(OCD) // OD
    sel = (cap_id[:, None] == cap_id[None, :]).astype(jnp.float32)   # (OCD, OCD)

    u_flat = u_predict.reshape(B, IC, OCD)                           # lane-dense, no copy

    # Batch blocking: big blocks to amortize the ~0.35us per-step pipeline overhead,
    # but always >= 2 grid steps (pipeline overlap + both v7x TensorCores busy).
    # BB is a multiple of 16 whenever BB < B so f32 and bf16 output blocks both meet
    # the sublane-tiling constraint; otherwise BB == B (full-dim block).
    if B <= 2 * batch_block:
        BB = min(((pl.cdiv(B, 2) + 15) // 16) * 16, batch_block)
        if BB >= B:
            BB = B
    else:
        BB = batch_block
    grid = (pl.cdiv(B, BB),)   # ragged tail handled by Pallas (no jnp.pad HBM pass)

    cost = pl.CostEstimate(
        flops=2 * B * IC * OCD + 2 * B * OCD * OCD + 5 * B * OCD,
        transcendentals=2 * B * OCD,                       # rsqrt + reciprocal
        bytes_accessed=(B * IC * OCD * itemsize            # u
                        + B * OCD * itemsize               # v
                        + (IC * OCD + OCD * OCD) * 4),     # c_exp + sel
    )

    v = pl.pallas_call(
        _routing_kernel,
        out_shape=jax.ShapeDtypeStruct((B, OCD), dtype),
        grid=grid,
        in_specs=[
            pl.BlockSpec((IC, OCD), lambda i: (0, 0)),               # c_exp, resident
            pl.BlockSpec((OCD, OCD), lambda i: (0, 0)),              # selector, resident
            pl.BlockSpec((BB, IC, OCD), lambda i: (i, 0, 0)),        # batch block of u
        ],
        out_specs=pl.BlockSpec((BB, OCD), lambda i: (i, 0)),
        compiler_params=pltpu.CompilerParams(
            dimension_semantics=("parallel",),
            vmem_limit_bytes=32 << 20),                    # BB=512 f32 needs ~17 MiB
        cost_estimate=cost,
    )(c_exp, sel, u_flat)

    v = v.reshape(B, OC, OD)

    # TODO(synk): the loop's b_batch += (u_predict * v).sum(-1) is dead w.r.t. the
    # returned value in the given module (c/s/v are never recomputed from it), so it
    # is not recomputed here; only the unsqueeze(1)-per-iteration shape is reproduced.
    if n_iterations > 0:
        v = v.reshape((B,) + (1,) * n_iterations + (OC, OD))
    return v


def _reference(u_predict, b, n_iterations):
    # Pure-JAX transcription of the given PyTorch forward (correctness check).
    B, IC, OC, OD = u_predict.shape
    c = jax.nn.softmax(b, axis=-1)[None, :, :, None]                 # (1, IC, OC, 1)
    s = jnp.sum(c * u_predict, axis=1)                               # (B, OC, OD)
    l2 = jnp.sum(s * s, axis=2)                                      # (B, OC)
    v = s * (l2 / (1.0 + l2) / jnp.sqrt(l2))[:, :, None]             # squash
    if n_iterations > 0:
        v = v.reshape((B,) + (1,) * n_iterations + (OC, OD))
    return v


if __name__ == "__main__":
    IC, OC, OD = 32, 8, 16      # OC*OD = 128 -> lane-dense last dim
    B = 40                      # not a multiple of the batch block -> exercises ragged tail
    n_iterations = 3

    key = jax.random.PRNGKey(0)
    u_predict = jax.random.normal(key, (B, IC, OC, OD), dtype=jnp.float32)
    # nn.Parameter(torch.zeros((input_caps, output_caps))) -> deterministic zeros
    b = jnp.zeros((IC, OC), dtype=jnp.float32)

    v = jax.block_until_ready(agreement_routing(u_predict, b, n_iterations))
    v_ref = _reference(u_predict, b, n_iterations)
    assert v.shape == (B,) + (1,) * n_iterations + (OC, OD), v.shape
    # Tolerance accommodates the approximate EUP reciprocal in the squash factor
    # (documented deviation; the structure/scale of v is otherwise exact f32).
    assert jnp.allclose(v, v_ref, atol=5e-3, rtol=5e-3), float(
        jnp.max(jnp.abs(v - v_ref)))

    # bf16 producer path: u stays bf16 in HBM (half the bytes of a mem-bound kernel);
    # the kernel upcasts to f32 internally.
    u_bf16 = u_predict.astype(jnp.bfloat16)
    v_bf16 = jax.block_until_ready(agreement_routing(u_bf16, b, n_iterations))
    v_ref_bf16 = _reference(u_bf16.astype(jnp.float32), b, n_iterations)
    assert v_bf16.shape == (B,) + (1,) * n_iterations + (OC, OD), v_bf16.shape
    assert jnp.allclose(v_bf16.astype(jnp.float32), v_ref_bf16, atol=3e-2, rtol=3e-2)

    print("KERNEL_OK")
</pallas_src>

<mosaic_0001>
module attributes {stable_mosaic.version = 11 : i64} {
  func.func @_routing_kernel(%arg0: i32, %arg1: memref<32x128xf32, #tpu.memory_space<vmem>>, %arg2: memref<128x128xf32, #tpu.memory_space<vmem>>, %arg3: memref<32x32x128xf32, #tpu.memory_space<vmem>>, %arg4: memref<32x128xf32, #tpu.memory_space<vmem>>) attributes {dimension_semantics = [#tpu.dimension_semantics<parallel>], iteration_bounds = array<i64: 2>, scalar_prefetch = 0 : i64, scratch_operands = 0 : i64, tpu.core_type = #tpu.core_type<tc>, window_params = [{pipeline_mode = #tpu.pipeline_mode<synchronous>, transform_indices = @transform_0, window_bounds = array<i64: 32, 128>}, {pipeline_mode = #tpu.pipeline_mode<synchronous>, transform_indices = @transform_1, window_bounds = array<i64: 128, 128>}, {transform_indices = @transform_2, window_bounds = array<i64: 32, 32, 128>}, {transform_indices = @transform_3, window_bounds = array<i64: 32, 128>}]} {
    %c0 = arith.constant 0 : index
    %c0_0 = arith.constant 0 : index
    %0 = vector.load %arg1[%c0, %c0_0] : memref<32x128xf32, #tpu.memory_space<vmem>>, vector<32x128xf32>
    %c0_1 = arith.constant 0 : index
    %c0_2 = arith.constant 0 : index
    %c0_3 = arith.constant 0 : index
    %1 = vector.load %arg3[%c0_1, %c0_2, %c0_3] : memref<32x32x128xf32, #tpu.memory_space<vmem>>, vector<32x32x128xf32>
    %2 = vector.shape_cast %0 : vector<32x128xf32> to vector<1x32x128xf32>
    %3 = vector.broadcast %2 : vector<1x32x128xf32> to vector<32x32x128xf32>
    %4 = arith.mulf %3, %1 : vector<32x32x128xf32>
    %cst = arith.constant dense<0.000000e+00> : vector<32x128xf32>
    %5 = vector.multi_reduction <add>, %4, %cst [1] : vector<32x32x128xf32> to vector<32x128xf32>
    %6 = arith.mulf %5, %5 : vector<32x128xf32>
    %c0_4 = arith.constant 0 : index
    %c0_5 = arith.constant 0 : index
    %7 = vector.load %arg2[%c0_4, %c0_5] : memref<128x128xf32, #tpu.memory_space<vmem>>, vector<128x128xf32>
    %cst_6 = arith.constant dense<0.000000e+00> : vector<32x128xf32>
    %8 = tpu.matmul %6, %7, %cst_6 {dimension_numbers = #tpu.dot_dimension_numbers<[1], [0], [0], [1], [0, 0, 1, 1], [], []>, precision = #tpu.contract_precision<fp32>} : vector<32x128xf32>, vector<128x128xf32>, vector<32x128xf32> -> vector<32x128xf32>
    %cst_7 = arith.constant 1.000000e-30 : f32
    %9 = vector.broadcast %cst_7 : f32 to vector<32x128xf32>
    %10 = arith.addf %8, %9 : vector<32x128xf32>
    %11 = math.rsqrt %10 : vector<32x128xf32>
    %12 = arith.mulf %8, %11 : vector<32x128xf32>
    %cst_8 = arith.constant 1.000000e+00 : f32
    %13 = vector.broadcast %cst_8 : f32 to vector<32x128xf32>
    %14 = arith.addf %13, %8 : vector<32x128xf32>
    %15 = tpu.reciprocal %14 {approx = true} : vector<32x128xf32> -> vector<32x128xf32>
    %16 = arith.mulf %12, %15 : vector<32x128xf32>
    %17 = arith.mulf %5, %16 : vector<32x128xf32>
    %c0_9 = arith.constant 0 : index
    %c0_10 = arith.constant 0 : index
    %18 = vector.load %arg4[%c0_9, %c0_10] : memref<32x128xf32, #tpu.memory_space<vmem>>, vector<32x128xf32>
    tpu.vector_store %arg4[%c0_9, %c0_10], %17 {strides = array<i32>} : memref<32x128xf32, #tpu.memory_space<vmem>>, vector<32x128xf32>,
    return
  }
  func.func @transform_0(%arg0: i32) -> (i32, i32) {
    %c0_i32 = arith.constant 0 : i32
    %c0_i32_0 = arith.constant 0 : i32
    %c0_i32_1 = arith.constant 0 : i32
    return %c0_i32, %c0_i32_0 : i32, i32
  }
  func.func @transform_1(%arg0: i32) -> (i32, i32) {
    %c0_i32 = arith.constant 0 : i32
    %c0_i32_0 = arith.constant 0 : i32
    %c0_i32_1 = arith.constant 0 : i32
    return %c0_i32, %c0_i32_0 : i32, i32
  }
  func.func @transform_2(%arg0: i32) -> (i32, i32, i32) {
    %c0_i32 = arith.constant 0 : i32
    %c0_i32_0 = arith.constant 0 : i32
    %c0_i32_1 = arith.constant 0 : i32
    return %arg0, %c0_i32, %c0_i32_0 : i32, i32, i32
  }
  func.func @transform_3(%arg0: i32) -> (i32, i32) {
    %c0_i32 = arith.constant 0 : i32
    %c0_i32_0 = arith.constant 0 : i32
    return %arg0, %c0_i32 : i32, i32
  }
}

</mosaic_0001>

<llo_original>
// kernel: tpu_custom_call.1
$region0: #{tpu_custom_call.1}
  #allocation0 [shape = 'u32[]', space=smem, size = 0x4, offset = 0x4, fixed_abs, tag = 'smem constant byte address 0x4 - core index']
  #allocation1 [shape = 'u32[72,128]{1,0:T(1,128)}', space=vmem, size = 0x9000, scoped, tag = 'internal scratch']
  %s0 = inlined_call_operand.hbm [shape: f32[32,128], index: 0, kind: input, shape index: {}]
  %s1 = inlined_call_operand.hbm [shape: f32[128,128], index: 1, kind: input, shape index: {}]
  %s2 = inlined_call_operand.hbm [shape: f32[40,32,128], index: 2, kind: input, shape index: {}]
  %s3 = inlined_call_operand.hbm [shape: f32[40,128], index: 3, kind: output, shape index: {}]
  %s4 = sld [smem:[#allocation0]]
  $region57: #{tpu_custom_call.1} parent=0
    _
  %s6 = ssub.s32 1, %s4
  %s7 = scalar_select 0, %s6, %s4
  $region1: #{tpu_custom_call.1} parent=0
    #allocation2 [shape = 'u8[16384]{0}', space=vmem, size = 0x4000, scoped, tag = 'input window, operand 0, single buffered']
    #allocation3 [shape = 's32[2]{0}', space=sflag, size = 0x8, scoped, tag = 'scoped memory for tpu_custom_call.1']
    #allocation4 [shape = 's32[2]{0}', space=sflag, size = 0x8, scoped, tag = 'scoped memory for tpu_custom_call.1']
    #allocation5 [shape = 'u8[65536]{0}', space=vmem, size = 0x10000, scoped, tag = 'input window, operand 1, single buffered']
    #allocation6 [shape = 's32[1]{0}', space=sflag, size = 0x4, scoped, tag = 'scoped memory for tpu_custom_call.1']
    #allocation7 [shape = 'u8[1048576]{0}', space=vmem, size = 0x100000, scoped, tag = 'input window, operand 2']
    #allocation8 [shape = 'u8[32768]{0}', space=vmem, size = 0x8000, scoped, tag = 'output window, operand 0']
    %8 = vsyncpa [#allocation3], 0
    %9 = vsyncpa [#allocation6], 0
    %10 = vsyncpa [#allocation4], 0
    %s11 = scalar_lea.sflag [#allocation4], 1
    %12 = vsyncpa %s11, 0
    loop: start=0, step=1, limit=4
    $region2: #{tpu_custom_call.1} parent=1 // loop_pre_header
      _
    $region3: #{tpu_custom_call.1} parent=1 // loop_header
      %s14 = sphi 0, %s18
      %p15 = scmp.ge.s32.totalorder %s14, 4
      %s22 = sphi 0, %s22
      %s24 = sphi 0, %s22
      %s25 = sphi 0, %s24
      %s39 = sphi 0, %s25
      %s43 = sphi 0, %s43
      %s45 = sphi 0, %s43
      %s46 = sphi 0, %s45
      %s60 = sphi 0, %s46
      %s66 = sphi 0, %s68
      %s69 = sphi 0, %s66
      %s70 = sphi 0, %s69
      %s86 = sphi 0, %s70
      %s92 = sphi 0, %s94
      %s95 = sphi 0, %s92
      %s96 = sphi 0, %s95
      %s112 = sphi 0, %s96
    $region4: #{tpu_custom_call.1} parent=1 // loop_header_branch
      %17 = sbr.rel (%p15) target = $region8
    $region5: #{tpu_custom_call.1} parent=1 // loop_body
      %s19 = ssub.s32 %s14, 1
      %s20 = ssub.s32 %s14, 2
      %s21 = sadd.s32 %s14, 1
      %s23 = sadd.s32 %s22, 1
      %p26 = scmp.eq.s32.totalorder %s14, 1
      %p27 = scmp.ne.s32.totalorder %s22, %s24
      %p28 = scmp.eq.s32.totalorder %s14, 0
      %p29 = por %p27, %p28
      %p30 = scmp.ne.s32.totalorder %s22, %s24
      %p31 = scmp.eq.s32.totalorder %s19, 1
      %p32 = por %p30, %p31
      %p33 = scmp.ne.s32.totalorder %s24, %s25
      %p34 = scmp.eq.s32.totalorder %s19, 0
      %p35 = por %p33, %p34
      %p36 = scmp.ne.s32.totalorder %s24, %s25
      %p37 = scmp.eq.s32.totalorder %s20, 1
      %p38 = por %p36, %p37
      %p40 = scmp.ne.s32.totalorder %s25, %s39
      %p41 = scmp.eq.s32.totalorder %s20, 0
      %p42 = por %p40, %p41
      %s44 = sadd.s32 %s43, 1
      %p47 = scmp.eq.s32.totalorder %s14, 1
      %p48 = scmp.ne.s32.totalorder %s43, %s45
      %p49 = scmp.eq.s32.totalorder %s14, 0
      %p50 = por %p48, %p49
      %p51 = scmp.ne.s32.totalorder %s43, %s45
      %p52 = scmp.eq.s32.totalorder %s19, 1
      %p53 = por %p51, %p52
      %p54 = scmp.ne.s32.totalorder %s45, %s46
      %p55 = scmp.eq.s32.totalorder %s19, 0
      %p56 = por %p54, %p55
      %p57 = scmp.ne.s32.totalorder %s45, %s46
      %p58 = scmp.eq.s32.totalorder %s20, 1
      %p59 = por %p57, %p58
      %p61 = scmp.ne.s32.totalorder %s46, %s60
      %p62 = scmp.eq.s32.totalorder %s20, 0
      %p63 = por %p61, %p62
      %s64 = ssub.s32 %s14, %s21
      %p65 = scmp.eq.s32.totalorder %s64, 0
      %s67 = sadd.s32 %s66, 1
      %s68 = scalar_select %p65, %s66, %s67
      %p71 = pneg %p65
      %p72 = scmp.eq.s32.totalorder %s14, 1
      %p73 = por %p71, %p72
      %p74 = scmp.ne.s32.totalorder %s66, %s69
      %p75 = scmp.eq.s32.totalorder %s14, 0
      %p76 = por %p74, %p75
      %p77 = scmp.ne.s32.totalorder %s66, %s69
      %p78 = scmp.eq.s32.totalorder %s19, 1
      %p79 = por %p77, %p78
      %p80 = scmp.ne.s32.totalorder %s69, %s70
      %p81 = scmp.eq.s32.totalorder %s19, 0
      %p82 = por %p80, %p81
      %p83 = scmp.ne.s32.totalorder %s69, %s70
      %p84 = scmp.eq.s32.totalorder %s20, 1
      %p85 = por %p83, %p84
      %p87 = scmp.ne.s32.totalorder %s70, %s86
      %p88 = scmp.eq.s32.totalorder %s20, 0
      %p89 = por %p87, %p88
      %s90 = ssub.s32 %s14, %s21
      %p91 = scmp.eq.s32.totalorder %s90, 0
      %s93 = sadd.s32 %s92, 1
      %s94 = scalar_select %p91, %s92, %s93
      %p97 = pneg %p91
      %p98 = scmp.eq.s32.totalorder %s14, 1
      %p99 = por %p97, %p98
      %p100 = scmp.ne.s32.totalorder %s92, %s95
      %p101 = scmp.eq.s32.totalorder %s14, 0
      %p102 = por %p100, %p101
      %p103 = scmp.ne.s32.totalorder %s92, %s95
      %p104 = scmp.eq.s32.totalorder %s19, 1
      %p105 = por %p103, %p104
      %p106 = scmp.ne.s32.totalorder %s95, %s96
      %p107 = scmp.eq.s32.totalorder %s19, 0
      %p108 = por %p106, %p107
      %p109 = scmp.ne.s32.totalorder %s95, %s96
      %p110 = scmp.eq.s32.totalorder %s20, 1
      %p111 = por %p109, %p110
      %p113 = scmp.ne.s32.totalorder %s96, %s112
      %p114 = scmp.eq.s32.totalorder %s20, 0
      %p115 = por %p113, %p114
      %p116 = scmp.le.s32.totalorder 1, %s14
      %p117 = scmp.lt.s32.totalorder %s14, 3
      %p118 = pnand %p116, %p117
      %p119 = pneg %p118
      // Predicated region
      $region9: #{tpu_custom_call.1} parent=5 // pred_check
        _
      $region10: #{tpu_custom_call.1} parent=5 // pred_check_branch
        %121 = sbr.rel (%p118) target = $region12
      $region11: #{tpu_custom_call.1} parent=5 // pred_region
        %s122 = ssub.s32 %s14, 1
        // Predicated region
        $region13: #{tpu_custom_call.1} parent=11 // pred_check
          %p123 = pneg %p35
        $region14: #{tpu_custom_call.1} parent=11 // pred_check_branch
          %125 = sbr.rel (%p123) target = $region16
        $region15: #{tpu_custom_call.1} parent=11 // pred_region
          %127 = vsyncadd [#allocation3], 0
          %s128 = sshll.u32 %s0, 4
          %s129 = int_to_ptr.hbm [resolvable:$true] %s128
          %s130 = sshll.u32 [#allocation2], 4
          %s131 = int_to_ptr.vmem [resolvable:$true] %s130
          %136 = dma.hbm_to_vmem [thread:$0]  %s129, 512, %s131, [#allocation3], 128, 128, 8
        $region16: #{tpu_custom_call.1} parent=11 // pred_fallthru
          _
        // Predicated region
        $region17: #{tpu_custom_call.1} parent=11 // pred_check
          %p137 = pneg %p56
        $region18: #{tpu_custom_call.1} parent=11 // pred_check_branch
          %139 = sbr.rel (%p137) target = $region20
        $region19: #{tpu_custom_call.1} parent=11 // pred_region
          %141 = vsyncadd [#allocation6], 0
          %s142 = sshll.u32 %s1, 4
          %s143 = int_to_ptr.hbm [resolvable:$true] %s142
          %s144 = sshll.u32 [#allocation5], 4
          %s145 = int_to_ptr.vmem [resolvable:$true] %s144
          %150 = dma.hbm_to_vmem [thread:$0]  %s143, 2048, %s145, [#allocation6], 128, 128, 8
        $region20: #{tpu_custom_call.1} parent=11 // pred_fallthru
          _
      $region12: #{tpu_custom_call.1} parent=5 // pred_fallthru
        _
      %p151 = scmp.lt.s32.totalorder %s14, 2
      // Predicated region
      $region21: #{tpu_custom_call.1} parent=5 // pred_check
        %p152 = pneg %p151
      $region22: #{tpu_custom_call.1} parent=5 // pred_check_branch
        %154 = sbr.rel (%p152) target = $region24
      $region23: #{tpu_custom_call.1} parent=5 // pred_region
        // Predicated region
        $region25: #{tpu_custom_call.1} parent=23 // pred_check
          %p155 = pneg %p76
        $region26: #{tpu_custom_call.1} parent=23 // pred_check_branch
          %157 = sbr.rel (%p155) target = $region28
        $region27: #{tpu_custom_call.1} parent=23 // pred_region
          %s158 = sand.u32 %s14, 1
          %s159 = scalar_lea.sflag [#allocation3], %s158
          %s160 = sand.u32 %s66, 1
          %s161 = smul.addr %s160, 1024
          %s162 = scalar_lea.vmem [#allocation7], %s161
          %s163 = smul.u32 32, %s14
          %s164 = ssub.s32 40, %s163
          %p165 = scmp.lt.s32.totalorder %s164, 32
          %s166 = scalar_select %p165, %s164, 32
          %s167 = smul.u32 8, %s166
          %s168 = smul.u32 %s167, 4
          %s169 = ssub.s32 1024, %s168
          %s170 = sshll.u32 %s169, 4
          %171 = vsyncadd %s159, %s170
          %p172 = scmp.ne.s32.totalorder 0, %s168
          %s173 = smul.addr %s163, 4
          %s174 = smul.addr %s173, 8
          %s175 = scalar_lea.hbm %s2, %s174
          %s176 = smul.u32 %s166, 4
          %s177 = smul.u32 8, %s176
          %s178 = sshll.u32 %s175, 4
          %s179 = int_to_ptr.hbm [resolvable:$true] %s178
          %s180 = sshll.u32 %s162, 4
          %s181 = int_to_ptr.vmem [resolvable:$true] %s180
          %s182 = sshll.u32 %s177, 4
          %186 = dma.hbm_to_vmem [thread:$0]  (%p172), %s179, %s182, %s181, %s159, 128, 128, 8
        $region28: #{tpu_custom_call.1} parent=23 // pred_fallthru
          _
      $region24: #{tpu_custom_call.1} parent=5 // pred_fallthru
        _
      %p187 = scmp.le.s32.totalorder 1, %s14
      %p188 = scmp.lt.s32.totalorder %s14, 3
      %p189 = pnand %p187, %p188
      %p190 = pneg %p189
      // Predicated region
      $region29: #{tpu_custom_call.1} parent=5 // pred_check
        _
      $region30: #{tpu_custom_call.1} parent=5 // pred_check_branch
        %192 = sbr.rel (%p189) target = $region32
      $region31: #{tpu_custom_call.1} parent=5 // pred_region
        %s193 = ssub.s32 %s14, 1
        // Predicated region
        $region33: #{tpu_custom_call.1} parent=31 // pred_check
          %p194 = pneg %p35
        $region34: #{tpu_custom_call.1} parent=31 // pred_check_branch
          %196 = sbr.rel (%p194) target = $region36
        $region35: #{tpu_custom_call.1} parent=31 // pred_region
          %198 = dma.done [#allocation3], 512
        $region36: #{tpu_custom_call.1} parent=31 // pred_fallthru
          _
        // Predicated region
        $region37: #{tpu_custom_call.1} parent=31 // pred_check
          %p199 = pneg %p56
        $region38: #{tpu_custom_call.1} parent=31 // pred_check_branch
          %201 = sbr.rel (%p199) target = $region40
        $region39: #{tpu_custom_call.1} parent=31 // pred_region
          %203 = dma.done [#allocation6], 2048
        $region40: #{tpu_custom_call.1} parent=31 // pred_fallthru
          _
        %s204 = sand.u32 %s19, 1
        %s205 = scalar_lea.sflag [#allocation3], %s204
        %s206 = sand.u32 %s69, 1
        %s207 = smul.addr %s206, 1024
        %s208 = scalar_lea.vmem [#allocation7], %s207
        // Predicated region
        $region41: #{tpu_custom_call.1} parent=31 // pred_check
          %p209 = pneg %p82
        $region42: #{tpu_custom_call.1} parent=31 // pred_check_branch
          %211 = sbr.rel (%p209) target = $region44
        $region43: #{tpu_custom_call.1} parent=31 // pred_region
          %213 = dma.done %s205, 16384
        $region44: #{tpu_custom_call.1} parent=31 // pred_fallthru
          _
        %p214 = pneg %p35
        %p215 = pneg %p32
        %p216 = pneg %p56
        %p217 = pneg %p53
        %s218 = sand.u32 %s19, 1
        %s219 = scalar_lea.sflag [#allocation3], %s218
        %s220 = sand.u32 %s69, 1
        %s221 = smul.addr %s220, 1024
        %s222 = scalar_lea.vmem [#allocation7], %s221
        %p223 = pneg %p82
        %p224 = pneg %p79
        %p225 = pneg %p108
        %p226 = pneg %p105
        %s227 = sand.u32 %s95, 1
        %s228 = scalar_lea.sflag [#allocation4], %s227
        %s229 = sand.u32 %s95, 1
        %s230 = smul.addr %s229, 32
        %s231 = scalar_lea.vmem [#allocation8], %s230
        %s232 = smul.u32 32, %s19
        %s233 = ssub.s32 40, %s232
        %p234 = scmp.lt.s32.totalorder %s233, 32
        %s235 = scalar_select %p234, %s233, 32
        %s236 = smul.u32 8, %s235
        %s237 = smul.u32 %s236, 4
        %s238 = smul.u32 4, %s19
        %s239 = ssub.s32 5, %s238
        %p240 = scmp.lt.s32.totalorder %s239, 4
        %s241 = scalar_select %p240, %s239, 4
        %s242 = smul.u32 8, %s241
        %v243 = vld [vmem:[#allocation2] sm:$0xff]
        %v244 = vld [vmem:[#allocation2 + $0x8] sm:$0xff]
        %v245 = vld [vmem:[#allocation2 + $0x10] sm:$0xff]
        %v246 = vld [vmem:[#allocation2 + $0x18] sm:$0xff]
        %v247 = vld [vmem:[%s208] sm:$0xff]
        %v248 = vld [vmem:[%s208 + $0x8] sm:$0xff]
        %v249 = vld [vmem:[%s208 + $0x10] sm:$0xff]
        %v250 = vld [vmem:[%s208 + $0x18] sm:$0xff]
        %v251 = vld [vmem:[%s208 + $0x20] sm:$0xff]
        %v252 = vld [vmem:[%s208 + $0x28] sm:$0xff]
        %v253 = vld [vmem:[%s208 + $0x30] sm:$0xff]
        %v254 = vld [vmem:[%s208 + $0x38] sm:$0xff]
        %v255 = vld [vmem:[%s208 + $0x40] sm:$0xff]
        %v256 = vld [vmem:[%s208 + $0x48] sm:$0xff]
        %v257 = vld [vmem:[%s208 + $0x50] sm:$0xff]
        %v258 = vld [vmem:[%s208 + $0x58] sm:$0xff]
        %v259 = vld [vmem:[%s208 + $0x60] sm:$0xff]
        %v260 = vld [vmem:[%s208 + $0x68] sm:$0xff]
        %v261 = vld [vmem:[%s208 + $0x70] sm:$0xff]
        %v262 = vld [vmem:[%s208 + $0x78] sm:$0xff]
        %v263 = vld [vmem:[%s208 + $0x80] sm:$0xff]
        %v264 = vld [vmem:[%s208 + $0x88] sm:$0xff]
        %v265 = vld [vmem:[%s208 + $0x90] sm:$0xff]
        %v266 = vld [vmem:[%s208 + $0x98] sm:$0xff]
        %v267 = vld [vmem:[%s208 + $0xa0] sm:$0xff]
        %v268 = vld [vmem:[%s208 + $0xa8] sm:$0xff]
        %v269 = vld [vmem:[%s208 + $0xb0] sm:$0xff]
        %v270 = vld [vmem:[%s208 + $0xb8] sm:$0xff]
        %v271 = vld [vmem:[%s208 + $0xc0] sm:$0xff]
        %v272 = vld [vmem:[%s208 + $0xc8] sm:$0xff]
        %v273 = vld [vmem:[%s208 + $0xd0] sm:$0xff]
        %v274 = vld [vmem:[%s208 + $0xd8] sm:$0xff]
        %v275 = vld [vmem:[%s208 + $0xe0] sm:$0xff]
        %v276 = vld [vmem:[%s208 + $0xe8] sm:$0xff]
        %v277 = vld [vmem:[%s208 + $0xf0] sm:$0xff]
        %v278 = vld [vmem:[%s208 + $0xf8] sm:$0xff]
        %v279 = vld [vmem:[%s208 + $0x100] sm:$0xff]
        %v280 = vld [vmem:[%s208 + $0x108] sm:$0xff]
        %v281 = vld [vmem:[%s208 + $0x110] sm:$0xff]
        %v282 = vld [vmem:[%s208 + $0x118] sm:$0xff]
        %v283 = vld [vmem:[%s208 + $0x120] sm:$0xff]
        %v284 = vld [vmem:[%s208 + $0x128] sm:$0xff]
        %v285 = vld [vmem:[%s208 + $0x130] sm:$0xff]
        %v286 = vld [vmem:[%s208 + $0x138] sm:$0xff]
        %v287 = vld [vmem:[%s208 + $0x140] sm:$0xff]
        %v288 = vld [vmem:[%s208 + $0x148] sm:$0xff]
        %v289 = vld [vmem:[%s208 + $0x150] sm:$0xff]
        %v290 = vld [vmem:[%s208 + $0x158] sm:$0xff]
        %v291 = vld [vmem:[%s208 + $0x160] sm:$0xff]
        %v292 = vld [vmem:[%s208 + $0x168] sm:$0xff]
        %v293 = vld [vmem:[%s208 + $0x170] sm:$0xff]
        %v294 = vld [vmem:[%s208 + $0x178] sm:$0xff]
        %v295 = vld [vmem:[%s208 + $0x180] sm:$0xff]
        %v296 = vld [vmem:[%s208 + $0x188] sm:$0xff]
        %v297 = vld [vmem:[%s208 + $0x190] sm:$0xff]
        %v298 = vld [vmem:[%s208 + $0x198] sm:$0xff]
        %v299 = vld [vmem:[%s208 + $0x1a0] sm:$0xff]
        %v300 = vld [vmem:[%s208 + $0x1a8] sm:$0xff]
        %v301 = vld [vmem:[%s208 + $0x1b0] sm:$0xff]
        %v302 = vld [vmem:[%s208 + $0x1b8] sm:$0xff]
        %v303 = vld [vmem:[%s208 + $0x1c0] sm:$0xff]
        %v304 = vld [vmem:[%s208 + $0x1c8] sm:$0xff]
        %v305 = vld [vmem:[%s208 + $0x1d0] sm:$0xff]
        %v306 = vld [vmem:[%s208 + $0x1d8] sm:$0xff]
        %v307 = vld [vmem:[%s208 + $0x1e0] sm:$0xff]
        %v308 = vld [vmem:[%s208 + $0x1e8] sm:$0xff]
        %v309 = vld [vmem:[%s208 + $0x1f0] sm:$0xff]
        %v310 = vld [vmem:[%s208 + $0x1f8] sm:$0xff]
        %v311 = vld [vmem:[%s208 + $0x200] sm:$0xff]
        %v312 = vld [vmem:[%s208 + $0x208] sm:$0xff]
        %v313 = vld [vmem:[%s208 + $0x210] sm:$0xff]
        %v314 = vld [vmem:[%s208 + $0x218] sm:$0xff]
        %v315 = vld [vmem:[%s208 + $0x220] sm:$0xff]
        %v316 = vld [vmem:[%s208 + $0x228] sm:$0xff]
        %v317 = vld [vmem:[%s208 + $0x230] sm:$0xff]
        %v318 = vld [vmem:[%s208 + $0x238] sm:$0xff]
        %v319 = vld [vmem:[%s208 + $0x240] sm:$0xff]
        %v320 = vld [vmem:[%s208 + $0x248] sm:$0xff]
        %v321 = vld [vmem:[%s208 + $0x250] sm:$0xff]
        %v322 = vld [vmem:[%s208 + $0x258] sm:$0xff]
        %v323 = vld [vmem:[%s208 + $0x260] sm:$0xff]
        %v324 = vld [vmem:[%s208 + $0x268] sm:$0xff]
        %v325 = vld [vmem:[%s208 + $0x270] sm:$0xff]
        %v326 = vld [vmem:[%s208 + $0x278] sm:$0xff]
        %v327 = vld [vmem:[%s208 + $0x280] sm:$0xff]
        %v328 = vld [vmem:[%s208 + $0x288] sm:$0xff]
        %v329 = vld [vmem:[%s208 + $0x290] sm:$0xff]
        %v330 = vld [vmem:[%s208 + $0x298] sm:$0xff]
        %v331 = vld [vmem:[%s208 + $0x2a0] sm:$0xff]
        %v332 = vld [vmem:[%s208 + $0x2a8] sm:$0xff]
        %v333 = vld [vmem:[%s208 + $0x2b0] sm:$0xff]
        %v334 = vld [vmem:[%s208 + $0x2b8] sm:$0xff]
        %v335 = vld [vmem:[%s208 + $0x2c0] sm:$0xff]
        %v336 = vld [vmem:[%s208 + $0x2c8] sm:$0xff]
        %v337 = vld [vmem:[%s208 + $0x2d0] sm:$0xff]
        %v338 = vld [vmem:[%s208 + $0x2d8] sm:$0xff]
        %v339 = vld [vmem:[%s208 + $0x2e0] sm:$0xff]
        %v340 = vld [vmem:[%s208 + $0x2e8] sm:$0xff]
        %v341 = vld [vmem:[%s208 + $0x2f0] sm:$0xff]
        %v342 = vld [vmem:[%s208 + $0x2f8] sm:$0xff]
        %v343 = vld [vmem:[%s208 + $0x300] sm:$0xff]
        %v344 = vld [vmem:[%s208 + $0x308] sm:$0xff]
        %v345 = vld [vmem:[%s208 + $0x310] sm:$0xff]
        %v346 = vld [vmem:[%s208 + $0x318] sm:$0xff]
        %v347 = vld [vmem:[%s208 + $0x320] sm:$0xff]
        %v348 = vld [vmem:[%s208 + $0x328] sm:$0xff]
        %v349 = vld [vmem:[%s208 + $0x330] sm:$0xff]
        %v350 = vld [vmem:[%s208 + $0x338] sm:$0xff]
        %v351 = vld [vmem:[%s208 + $0x340] sm:$0xff]
        %v352 = vld [vmem:[%s208 + $0x348] sm:$0xff]
        %v353 = vld [vmem:[%s208 + $0x350] sm:$0xff]
        %v354 = vld [vmem:[%s208 + $0x358] sm:$0xff]
        %v355 = vld [vmem:[%s208 + $0x360] sm:$0xff]
        %v356 = vld [vmem:[%s208 + $0x368] sm:$0xff]
        %v357 = vld [vmem:[%s208 + $0x370] sm:$0xff]
        %v358 = vld [vmem:[%s208 + $0x378] sm:$0xff]
        %v359 = vld [vmem:[%s208 + $0x380] sm:$0xff]
        %v360 = vld [vmem:[%s208 + $0x388] sm:$0xff]
        %v361 = vld [vmem:[%s208 + $0x390] sm:$0xff]
        %v362 = vld [vmem:[%s208 + $0x398] sm:$0xff]
        %v363 = vld [vmem:[%s208 + $0x3a0] sm:$0xff]
        %v364 = vld [vmem:[%s208 + $0x3a8] sm:$0xff]
        %v365 = vld [vmem:[%s208 + $0x3b0] sm:$0xff]
        %v366 = vld [vmem:[%s208 + $0x3b8] sm:$0xff]
        %v367 = vld [vmem:[%s208 + $0x3c0] sm:$0xff]
        %v368 = vld [vmem:[%s208 + $0x3c8] sm:$0xff]
        %v369 = vld [vmem:[%s208 + $0x3d0] sm:$0xff]
        %v370 = vld [vmem:[%s208 + $0x3d8] sm:$0xff]
        %v371 = vld [vmem:[%s208 + $0x3e0] sm:$0xff]
        %v372 = vld [vmem:[%s208 + $0x3e8] sm:$0xff]
        %v373 = vld [vmem:[%s208 + $0x3f0] sm:$0xff]
        %v374 = vld [vmem:[%s208 + $0x3f8] sm:$0xff]
        %v375 = vmul.f32 %v243, %v247
        %v376 = vmul.f32 %v244, %v248
        %v377 = vmul.f32 %v245, %v249
        %v378 = vmul.f32 %v246, %v250
        %v379 = vmul.f32 %v243, %v251
        %v380 = vmul.f32 %v244, %v252
        %v381 = vmul.f32 %v245, %v253
        %v382 = vmul.f32 %v246, %v254
        %v383 = vmul.f32 %v243, %v255
        %v384 = vmul.f32 %v244, %v256
        %v385 = vmul.f32 %v245, %v257
        %v386 = vmul.f32 %v246, %v258
        %v387 = vmul.f32 %v243, %v259
        %v388 = vmul.f32 %v244, %v260
        %v389 = vmul.f32 %v245, %v261
        %v390 = vmul.f32 %v246, %v262
        %v391 = vmul.f32 %v243, %v263
        %v392 = vmul.f32 %v244, %v264
        %v393 = vmul.f32 %v245, %v265
        %v394 = vmul.f32 %v246, %v266
        %v395 = vmul.f32 %v243, %v267
        %v396 = vmul.f32 %v244, %v268
        %v397 = vmul.f32 %v245, %v269
        %v398 = vmul.f32 %v246, %v270
        %v399 = vmul.f32 %v243, %v271
        %v400 = vmul.f32 %v244, %v272
        %v401 = vmul.f32 %v245, %v273
        %v402 = vmul.f32 %v246, %v274
        %v403 = vmul.f32 %v243, %v275
        %v404 = vmul.f32 %v244, %v276
        %v405 = vmul.f32 %v245, %v277
        %v406 = vmul.f32 %v246, %v278
        %v407 = vmul.f32 %v243, %v279
        %v408 = vmul.f32 %v244, %v280
        %v409 = vmul.f32 %v245, %v281
        %v410 = vmul.f32 %v246, %v282
        %v411 = vmul.f32 %v243, %v283
        %v412 = vmul.f32 %v244, %v284
        %v413 = vmul.f32 %v245, %v285
        %v414 = vmul.f32 %v246, %v286
        %v415 = vmul.f32 %v243, %v287
        %v416 = vmul.f32 %v244, %v288
        %v417 = vmul.f32 %v245, %v289
        %v418 = vmul.f32 %v246, %v290
        %v419 = vmul.f32 %v243, %v291
        %v420 = vmul.f32 %v244, %v292
        %v421 = vmul.f32 %v245, %v293
        %v422 = vmul.f32 %v246, %v294
        %v423 = vmul.f32 %v243, %v295
        %v424 = vmul.f32 %v244, %v296
        %v425 = vmul.f32 %v245, %v297
        %v426 = vmul.f32 %v246, %v298
        %v427 = vmul.f32 %v243, %v299
        %v428 = vmul.f32 %v244, %v300
        %v429 = vmul.f32 %v245, %v301
        %v430 = vmul.f32 %v246, %v302
        %v431 = vmul.f32 %v243, %v303
        %v432 = vmul.f32 %v244, %v304
        %v433 = vmul.f32 %v245, %v305
        %v434 = vmul.f32 %v246, %v306
        %v435 = vmul.f32 %v243, %v307
        %v436 = vmul.f32 %v244, %v308
        %v437 = vmul.f32 %v245, %v309
        %v438 = vmul.f32 %v246, %v310
        %v439 = vmul.f32 %v243, %v311
        %v440 = vmul.f32 %v244, %v312
        %v441 = vmul.f32 %v245, %v313
        %v442 = vmul.f32 %v246, %v314
        %v443 = vmul.f32 %v243, %v315
        %v444 = vmul.f32 %v244, %v316
        %v445 = vmul.f32 %v245, %v317
        %v446 = vmul.f32 %v246, %v318
        %v447 = vmul.f32 %v243, %v319
        %v448 = vmul.f32 %v244, %v320
        %v449 = vmul.f32 %v245, %v321
        %v450 = vmul.f32 %v246, %v322
        %v451 = vmul.f32 %v243, %v323
        %v452 = vmul.f32 %v244, %v324
        %v453 = vmul.f32 %v245, %v325
        %v454 = vmul.f32 %v246, %v326
        %v455 = vmul.f32 %v243, %v327
        %v456 = vmul.f32 %v244, %v328
        %v457 = vmul.f32 %v245, %v329
        %v458 = vmul.f32 %v246, %v330
        %v459 = vmul.f32 %v243, %v331
        %v460 = vmul.f32 %v244, %v332
        %v461 = vmul.f32 %v245, %v333
        %v462 = vmul.f32 %v246, %v334
        %v463 = vmul.f32 %v243, %v335
        %v464 = vmul.f32 %v244, %v336
        %v465 = vmul.f32 %v245, %v337
        %v466 = vmul.f32 %v246, %v338
        %v467 = vmul.f32 %v243, %v339
        %v468 = vmul.f32 %v244, %v340
        %v469 = vmul.f32 %v245, %v341
        %v470 = vmul.f32 %v246, %v342
        %v471 = vmul.f32 %v243, %v343
        %v472 = vmul.f32 %v244, %v344
        %v473 = vmul.f32 %v245, %v345
        %v474 = vmul.f32 %v246, %v346
        %v475 = vmul.f32 %v243, %v347
        %v476 = vmul.f32 %v244, %v348
        %v477 = vmul.f32 %v245, %v349
        %v478 = vmul.f32 %v246, %v350
        %v479 = vmul.f32 %v243, %v351
        %v480 = vmul.f32 %v244, %v352
        %v481 = vmul.f32 %v245, %v353
        %v482 = vmul.f32 %v246, %v354
        %v483 = vmul.f32 %v243, %v355
        %v484 = vmul.f32 %v244, %v356
        %v485 = vmul.f32 %v245, %v357
        %v486 = vmul.f32 %v246, %v358
        %v487 = vmul.f32 %v243, %v359
        %v488 = vmul.f32 %v244, %v360
        %v489 = vmul.f32 %v245, %v361
        %v490 = vmul.f32 %v246, %v362
        %v491 = vmul.f32 %v243, %v363
        %v492 = vmul.f32 %v244, %v364
        %v493 = vmul.f32 %v245, %v365
        %v494 = vmul.f32 %v246, %v366
        %v495 = vmul.f32 %v243, %v367
        %v496 = vmul.f32 %v244, %v368
        %v497 = vmul.f32 %v245, %v369
        %v498 = vmul.f32 %v246, %v370
        %v499 = vmul.f32 %v243, %v371
        %v500 = vmul.f32 %v244, %v372
        %v501 = vmul.f32 %v245, %v373
        %v502 = vmul.f32 %v246, %v374
        %v503 = vadd.f32 %v375, %v376
        %v504 = vadd.f32 %v503, %v377
        %v505 = vadd.f32 %v504, %v378
        %v506 = vrot.slane %v505, 4
        %v507 = vadd.f32 %v505, %v506
        %v508 = vrot.slane %v507, 2
        %v509 = vadd.f32 %v507, %v508
        %v510 = vrot.slane %v509, 1
        %v511 = vadd.f32 %v509, %v510
        %v512 = vadd.f32 %v379, %v380
        %v513 = vadd.f32 %v512, %v381
        %v514 = vadd.f32 %v513, %v382
        %v515 = vrot.slane %v514, 4
        %v516 = vadd.f32 %v514, %v515
        %v517 = vrot.slane %v516, 2
        %v518 = vadd.f32 %v516, %v517
        %v519 = vrot.slane %v518, 1
        %v520 = vadd.f32 %v518, %v519
        %v521 = vadd.f32 %v383, %v384
        %v522 = vadd.f32 %v521, %v385
        %v523 = vadd.f32 %v522, %v386
        %v524 = vrot.slane %v523, 4
        %v525 = vadd.f32 %v523, %v524
        %v526 = vrot.slane %v525, 2
        %v527 = vadd.f32 %v525, %v526
        %v528 = vrot.slane %v527, 1
        %v529 = vadd.f32 %v527, %v528
        %v530 = vadd.f32 %v387, %v388
        %v531 = vadd.f32 %v530, %v389
        %v532 = vadd.f32 %v531, %v390
        %v533 = vrot.slane %v532, 4
        %v534 = vadd.f32 %v532, %v533
        %v535 = vrot.slane %v534, 2
        %v536 = vadd.f32 %v534, %v535
        %v537 = vrot.slane %v536, 1
        %v538 = vadd.f32 %v536, %v537
        %v539 = vadd.f32 %v391, %v392
        %v540 = vadd.f32 %v539, %v393
        %v541 = vadd.f32 %v540, %v394
        %v542 = vrot.slane %v541, 4
        %v543 = vadd.f32 %v541, %v542
        %v544 = vrot.slane %v543, 2
        %v545 = vadd.f32 %v543, %v544
        %v546 = vrot.slane %v545, 1
        %v547 = vadd.f32 %v545, %v546
        %v548 = vadd.f32 %v395, %v396
        %v549 = vadd.f32 %v548, %v397
        %v550 = vadd.f32 %v549, %v398
        %v551 = vrot.slane %v550, 4
        %v552 = vadd.f32 %v550, %v551
        %v553 = vrot.slane %v552, 2
        %v554 = vadd.f32 %v552, %v553
        %v555 = vrot.slane %v554, 1
        %v556 = vadd.f32 %v554, %v555
        %v557 = vadd.f32 %v399, %v400
        %v558 = vadd.f32 %v557, %v401
        %v559 = vadd.f32 %v558, %v402
        %v560 = vrot.slane %v559, 4
        %v561 = vadd.f32 %v559, %v560
        %v562 = vrot.slane %v561, 2
        %v563 = vadd.f32 %v561, %v562
        %v564 = vrot.slane %v563, 1
        %v565 = vadd.f32 %v563, %v564
        %v566 = vadd.f32 %v403, %v404
        %v567 = vadd.f32 %v566, %v405
        %v568 = vadd.f32 %v567, %v406
        %v569 = vrot.slane %v568, 4
        %v570 = vadd.f32 %v568, %v569
        %v571 = vrot.slane %v570, 2
        %v572 = vadd.f32 %v570, %v571
        %v573 = vrot.slane %v572, 1
        %v574 = vadd.f32 %v572, %v573
        %v575 = vadd.f32 %v407, %v408
        %v576 = vadd.f32 %v575, %v409
        %v577 = vadd.f32 %v576, %v410
        %v578 = vrot.slane %v577, 4
        %v579 = vadd.f32 %v577, %v578
        %v580 = vrot.slane %v579, 2
        %v581 = vadd.f32 %v579, %v580
        %v582 = vrot.slane %v581, 1
        %v583 = vadd.f32 %v581, %v582
        %v584 = vadd.f32 %v411, %v412
        %v585 = vadd.f32 %v584, %v413
        %v586 = vadd.f32 %v585, %v414
        %v587 = vrot.slane %v586, 4
        %v588 = vadd.f32 %v586, %v587
        %v589 = vrot.slane %v588, 2
        %v590 = vadd.f32 %v588, %v589
        %v591 = vrot.slane %v590, 1
        %v592 = vadd.f32 %v590, %v591
        %v593 = vadd.f32 %v415, %v416
        %v594 = vadd.f32 %v593, %v417
        %v595 = vadd.f32 %v594, %v418
        %v596 = vrot.slane %v595, 4
        %v597 = vadd.f32 %v595, %v596
        %v598 = vrot.slane %v597, 2
        %v599 = vadd.f32 %v597, %v598
        %v600 = vrot.slane %v599, 1
        %v601 = vadd.f32 %v599, %v600
        %v602 = vadd.f32 %v419, %v420
        %v603 = vadd.f32 %v602, %v421
        %v604 = vadd.f32 %v603, %v422
        %v605 = vrot.slane %v604, 4
        %v606 = vadd.f32 %v604, %v605
        %v607 = vrot.slane %v606, 2
        %v608 = vadd.f32 %v606, %v607
        %v609 = vrot.slane %v608, 1
        %v610 = vadd.f32 %v608, %v609
        %v611 = vadd.f32 %v423, %v424
        %v612 = vadd.f32 %v611, %v425
        %v613 = vadd.f32 %v612, %v426
        %v614 = vrot.slane %v613, 4
        %v615 = vadd.f32 %v613, %v614
        %v616 = vrot.slane %v615, 2
        %v617 = vadd.f32 %v615, %v616
        %v618 = vrot.slane %v617, 1
        %v619 = vadd.f32 %v617, %v618
        %v620 = vadd.f32 %v427, %v428
        %v621 = vadd.f32 %v620, %v429
        %v622 = vadd.f32 %v621, %v430
        %v623 = vrot.slane %v622, 4
        %v624 = vadd.f32 %v622, %v623
        %v625 = vrot.slane %v624, 2
        %v626 = vadd.f32 %v624, %v625
        %v627 = vrot.slane %v626, 1
        %v628 = vadd.f32 %v626, %v627
        %v629 = vadd.f32 %v431, %v432
        %v630 = vadd.f32 %v629, %v433
        %v631 = vadd.f32 %v630, %v434
        %v632 = vrot.slane %v631, 4
        %v633 = vadd.f32 %v631, %v632
        %v634 = vrot.slane %v633, 2
        %v635 = vadd.f32 %v633, %v634
        %v636 = vrot.slane %v635, 1
        %v637 = vadd.f32 %v635, %v636
        %v638 = vadd.f32 %v435, %v436
        %v639 = vadd.f32 %v638, %v437
        %v640 = vadd.f32 %v639, %v438
        %v641 = vrot.slane %v640, 4
        %v642 = vadd.f32 %v640, %v641
        %v643 = vrot.slane %v642, 2
        %v644 = vadd.f32 %v642, %v643
        %v645 = vrot.slane %v644, 1
        %v646 = vadd.f32 %v644, %v645
        %v647 = vadd.f32 %v439, %v440
        %v648 = vadd.f32 %v647, %v441
        %v649 = vadd.f32 %v648, %v442
        %v650 = vrot.slane %v649, 4
        %v651 = vadd.f32 %v649, %v650
        %v652 = vrot.slane %v651, 2
        %v653 = vadd.f32 %v651, %v652
        %v654 = vrot.slane %v653, 1
        %v655 = vadd.f32 %v653, %v654
        %v656 = vadd.f32 %v443, %v444
        %v657 = vadd.f32 %v656, %v445
        %v658 = vadd.f32 %v657, %v446
        %v659 = vrot.slane %v658, 4
        %v660 = vadd.f32 %v658, %v659
        %v661 = vrot.slane %v660, 2
        %v662 = vadd.f32 %v660, %v661
        %v663 = vrot.slane %v662, 1
        %v664 = vadd.f32 %v662, %v663
        %v665 = vadd.f32 %v447, %v448
        %v666 = vadd.f32 %v665, %v449
        %v667 = vadd.f32 %v666, %v450
        %v668 = vrot.slane %v667, 4
        %v669 = vadd.f32 %v667, %v668
        %v670 = vrot.slane %v669, 2
        %v671 = vadd.f32 %v669, %v670
        %v672 = vrot.slane %v671, 1
        %v673 = vadd.f32 %v671, %v672
        %v674 = vadd.f32 %v451, %v452
        %v675 = vadd.f32 %v674, %v453
        %v676 = vadd.f32 %v675, %v454
        %v677 = vrot.slane %v676, 4
        %v678 = vadd.f32 %v676, %v677
        %v679 = vrot.slane %v678, 2
        %v680 = vadd.f32 %v678, %v679
        %v681 = vrot.slane %v680, 1
        %v682 = vadd.f32 %v680, %v681
        %v683 = vadd.f32 %v455, %v456
        %v684 = vadd.f32 %v683, %v457
        %v685 = vadd.f32 %v684, %v458
        %v686 = vrot.slane %v685, 4
        %v687 = vadd.f32 %v685, %v686
        %v688 = vrot.slane %v687, 2
        %v689 = vadd.f32 %v687, %v688
        %v690 = vrot.slane %v689, 1
        %v691 = vadd.f32 %v689, %v690
        %v692 = vadd.f32 %v459, %v460
        %v693 = vadd.f32 %v692, %v461
        %v694 = vadd.f32 %v693, %v462
        %v695 = vrot.slane %v694, 4
        %v696 = vadd.f32 %v694, %v695
        %v697 = vrot.slane %v696, 2
        %v698 = vadd.f32 %v696, %v697
        %v699 = vrot.slane %v698, 1
        %v700 = vadd.f32 %v698, %v699
        %v701 = vadd.f32 %v463, %v464
        %v702 = vadd.f32 %v701, %v465
        %v703 = vadd.f32 %v702, %v466
        %v704 = vrot.slane %v703, 4
        %v705 = vadd.f32 %v703, %v704
        %v706 = vrot.slane %v705, 2
        %v707 = vadd.f32 %v705, %v706
        %v708 = vrot.slane %v707, 1
        %v709 = vadd.f32 %v707, %v708
        %v710 = vadd.f32 %v467, %v468
        %v711 = vadd.f32 %v710, %v469
        %v712 = vadd.f32 %v711, %v470
        %v713 = vrot.slane %v712, 4
        %v714 = vadd.f32 %v712, %v713
        %v715 = vrot.slane %v714, 2
        %v716 = vadd.f32 %v714, %v715
        %v717 = vrot.slane %v716, 1
        %v718 = vadd.f32 %v716, %v717
        %v719 = vadd.f32 %v471, %v472
        %v720 = vadd.f32 %v719, %v473
        %v721 = vadd.f32 %v720, %v474
        %v722 = vrot.slane %v721, 4
        %v723 = vadd.f32 %v721, %v722
        %v724 = vrot.slane %v723, 2
        %v725 = vadd.f32 %v723, %v724
        %v726 = vrot.slane %v725, 1
        %v727 = vadd.f32 %v725, %v726
        %v728 = vadd.f32 %v475, %v476
        %v729 = vadd.f32 %v728, %v477
        %v730 = vadd.f32 %v729, %v478
        %v731 = vrot.slane %v730, 4
        %v732 = vadd.f32 %v730, %v731
        %v733 = vrot.slane %v732, 2
        %v734 = vadd.f32 %v732, %v733
        %v735 = vrot.slane %v734, 1
        %v736 = vadd.f32 %v734, %v735
        %v737 = vadd.f32 %v479, %v480
        %v738 = vadd.f32 %v737, %v481
        %v739 = vadd.f32 %v738, %v482
        %v740 = vrot.slane %v739, 4
        %v741 = vadd.f32 %v739, %v740
        %v742 = vrot.slane %v741, 2
        %v743 = vadd.f32 %v741, %v742
        %v744 = vrot.slane %v743, 1
        %v745 = vadd.f32 %v743, %v744
        %v746 = vadd.f32 %v483, %v484
        %v747 = vadd.f32 %v746, %v485
        %v748 = vadd.f32 %v747, %v486
        %v749 = vrot.slane %v748, 4
        %v750 = vadd.f32 %v748, %v749
        %v751 = vrot.slane %v750, 2
        %v752 = vadd.f32 %v750, %v751
        %v753 = vrot.slane %v752, 1
        %v754 = vadd.f32 %v752, %v753
        %v755 = vadd.f32 %v487, %v488
        %v756 = vadd.f32 %v755, %v489
        %v757 = vadd.f32 %v756, %v490
        %v758 = vrot.slane %v757, 4
        %v759 = vadd.f32 %v757, %v758
        %v760 = vrot.slane %v759, 2
        %v761 = vadd.f32 %v759, %v760
        %v762 = vrot.slane %v761, 1
        %v763 = vadd.f32 %v761, %v762
        %v764 = vadd.f32 %v491, %v492
        %v765 = vadd.f32 %v764, %v493
        %v766 = vadd.f32 %v765, %v494
        %v767 = vrot.slane %v766, 4
        %v768 = vadd.f32 %v766, %v767
        %v769 = vrot.slane %v768, 2
        %v770 = vadd.f32 %v768, %v769
        %v771 = vrot.slane %v770, 1
        %v772 = vadd.f32 %v770, %v771
        %v773 = vadd.f32 %v495, %v496
        %v774 = vadd.f32 %v773, %v497
        %v775 = vadd.f32 %v774, %v498
        %v776 = vrot.slane %v775, 4
        %v777 = vadd.f32 %v775, %v776
        %v778 = vrot.slane %v777, 2
        %v779 = vadd.f32 %v777, %v778
        %v780 = vrot.slane %v779, 1
        %v781 = vadd.f32 %v779, %v780
        %v782 = vadd.f32 %v499, %v500
        %v783 = vadd.f32 %v782, %v501
        %v784 = vadd.f32 %v783, %v502
        %v785 = vrot.slane %v784, 4
        %v786 = vadd.f32 %v784, %v785
        %v787 = vrot.slane %v786, 2
        %v788 = vadd.f32 %v786, %v787
        %v789 = vrot.slane %v788, 1
        %v790 = vadd.f32 %v788, %v789
        %v791 = vmul.f32 %v511, %v511
        %v792 = vmul.f32 %v520, %v520
        %v793 = vmul.f32 %v529, %v529
        %v794 = vmul.f32 %v538, %v538
        %v795 = vmul.f32 %v547, %v547
        %v796 = vmul.f32 %v556, %v556
        %v797 = vmul.f32 %v565, %v565
        %v798 = vmul.f32 %v574, %v574
        %v799 = vmul.f32 %v583, %v583
        %v800 = vmul.f32 %v592, %v592
        %v801 = vmul.f32 %v601, %v601
        %v802 = vmul.f32 %v610, %v610
        %v803 = vmul.f32 %v619, %v619
        %v804 = vmul.f32 %v628, %v628
        %v805 = vmul.f32 %v637, %v637
        %v806 = vmul.f32 %v646, %v646
        %v807 = vmul.f32 %v655, %v655
        %v808 = vmul.f32 %v664, %v664
        %v809 = vmul.f32 %v673, %v673
        %v810 = vmul.f32 %v682, %v682
        %v811 = vmul.f32 %v691, %v691
        %v812 = vmul.f32 %v700, %v700
        %v813 = vmul.f32 %v709, %v709
        %v814 = vmul.f32 %v718, %v718
        %v815 = vmul.f32 %v727, %v727
        %v816 = vmul.f32 %v736, %v736
        %v817 = vmul.f32 %v745, %v745
        %v818 = vmul.f32 %v754, %v754
        %v819 = vmul.f32 %v763, %v763
        %v820 = vmul.f32 %v772, %v772
        %v821 = vmul.f32 %v781, %v781
        %v822 = vmul.f32 %v790, %v790
        %v823 = vld [vmem:[#allocation5] sm:$0xff]
        %v824 = vld [vmem:[#allocation5 + $0x8] sm:$0xff]
        %v825 = vld [vmem:[#allocation5 + $0x10] sm:$0xff]
        %v826 = vld [vmem:[#allocation5 + $0x18] sm:$0xff]
        %v827 = vld [vmem:[#allocation5 + $0x20] sm:$0xff]
        %v828 = vld [vmem:[#allocation5 + $0x28] sm:$0xff]
        %v829 = vld [vmem:[#allocation5 + $0x30] sm:$0xff]
        %v830 = vld [vmem:[#allocation5 + $0x38] sm:$0xff]
        %v831 = vld [vmem:[#allocation5 + $0x40] sm:$0xff]
        %v832 = vld [vmem:[#allocation5 + $0x48] sm:$0xff]
        %v833 = vld [vmem:[#allocation5 + $0x50] sm:$0xff]
        %v834 = vld [vmem:[#allocation5 + $0x58] sm:$0xff]
        %v835 = vld [vmem:[#allocation5 + $0x60] sm:$0xff]
        %v836 = vld [vmem:[#allocation5 + $0x68] sm:$0xff]
        %v837 = vld [vmem:[#allocation5 + $0x70] sm:$0xff]
        %v838 = vld [vmem:[#allocation5 + $0x78] sm:$0xff]
        %vm871 = vcmask 1041409
        %v872 = vsel %vm871, %v792, %v791
        %vm873 = vcmask 1042434
        %v874 = vsel %vm873, %v793, %v872
        %vm875 = vcmask 1043459
        %v876 = vsel %vm875, %v794, %v874
        %vm877 = vcmask 1044484
        %v878 = vsel %vm877, %v795, %v876
        %vm879 = vcmask 1045509
        %v880 = vsel %vm879, %v796, %v878
        %vm881 = vcmask 1046534
        %v882 = vsel %vm881, %v797, %v880
        %vm883 = vcmask 1047559
        %v884 = vsel %vm883, %v798, %v882
        %v885 = vsel %vm871, %v800, %v799
        %v886 = vsel %vm873, %v801, %v885
        %v887 = vsel %vm875, %v802, %v886
        %v888 = vsel %vm877, %v803, %v887
        %v889 = vsel %vm879, %v804, %v888
        %v890 = vsel %vm881, %v805, %v889
        %v891 = vsel %vm883, %v806, %v890
        %v892 = vsel %vm871, %v808, %v807
        %v893 = vsel %vm873, %v809, %v892
        %v894 = vsel %vm875, %v810, %v893
        %v895 = vsel %vm877, %v811, %v894
        %v896 = vsel %vm879, %v812, %v895
        %v897 = vsel %vm881, %v813, %v896
        %v898 = vsel %vm883, %v814, %v897
        %v899 = vsel %vm871, %v816, %v815
        %v900 = vsel %vm873, %v817, %v899
        %v901 = vsel %vm875, %v818, %v900
        %v902 = vsel %vm877, %v819, %v901
        %v903 = vsel %vm879, %v820, %v902
        %v904 = vsel %vm881, %v821, %v903
        %v905 = vsel %vm883, %v822, %v904
        %v910 = vand.u32 %v838, 4294901760
        %911 = vmatpush.msra.mxu0 %v910
        %v912 = vand.u32 %v837, 4294901760
        %913 = vmatpush.msra.mxu0 %v912
        %v914 = vand.u32 %v836, 4294901760
        %915 = vmatpush.msra.mxu0 %v914
        %v916 = vand.u32 %v835, 4294901760
        %917 = vmatpush.msra.mxu0 %v916
        %v918 = vand.u32 %v834, 4294901760
        %919 = vmatpush.msra.mxu0 %v918
        %v920 = vand.u32 %v833, 4294901760
        %921 = vmatpush.msra.mxu0 %v920
        %v922 = vand.u32 %v832, 4294901760
        %923 = vmatpush.msra.mxu0 %v922
        %v924 = vand.u32 %v831, 4294901760
        %925 = vmatpush.msra.mxu0 %v924
        %v926 = vand.u32 %v830, 4294901760
        %927 = vmatpush.msra.mxu0 %v926
        %v928 = vand.u32 %v829, 4294901760
        %929 = vmatpush.msra.mxu0 %v928
        %v930 = vand.u32 %v828, 4294901760
        %931 = vmatpush.msra.mxu0 %v930
        %v932 = vand.u32 %v827, 4294901760
        %933 = vmatpush.msra.mxu0 %v932
        %v934 = vand.u32 %v826, 4294901760
        %935 = vmatpush.msra.mxu0 %v934
        %v936 = vand.u32 %v825, 4294901760
        %937 = vmatpush.msra.mxu0 %v936
        %v938 = vand.u32 %v824, 4294901760
        %939 = vmatpush.msra.mxu0 %v938
        %v940 = vand.u32 %v823, 4294901760
        %941 = vmatpush.msra.mxu0 %v940
        %v942 = vand.u32 %v884, 4294901760
        %v943 = vsub.f32 %v884, %v942
        %v944 = vand.u32 %v943, 4294901760
        %v945 = vsub.f32 %v943, %v944
        %v946 = vand.u32 %v945, 4294901760
        %947 = vmatmul.f32.gmra.mxu0 %v946
        %v948 = vpop.f32.mrf.mxu0
        %v949 = vadd.f32 0.0, %v948
        %v950 = vand.u32 %v891, 4294901760
        %v951 = vsub.f32 %v891, %v950
        %v952 = vand.u32 %v951, 4294901760
        %v953 = vsub.f32 %v951, %v952
        %v954 = vand.u32 %v953, 4294901760
        %955 = vmatmul.f32.gmra.mxu0 %v954
        %v956 = vpop.f32.mrf.mxu0
        %v957 = vadd.f32 0.0, %v956
        %v958 = vand.u32 %v898, 4294901760
        %v959 = vsub.f32 %v898, %v958
        %v960 = vand.u32 %v959, 4294901760
        %v961 = vsub.f32 %v959, %v960
        %v962 = vand.u32 %v961, 4294901760
        %963 = vmatmul.f32.gmra.mxu0 %v962
        %v964 = vpop.f32.mrf.mxu0
        %v965 = vadd.f32 0.0, %v964
        %v966 = vand.u32 %v905, 4294901760
        %v967 = vsub.f32 %v905, %v966
        %v968 = vand.u32 %v967, 4294901760
        %v969 = vsub.f32 %v967, %v968
        %v970 = vand.u32 %v969, 4294901760
        %971 = vmatmul.f32.gmra.mxu0 %v970
        %v972 = vpop.f32.mrf.mxu0
        %v973 = vadd.f32 0.0, %v972
        %974 = vdwg.mxu0
        %v975 = vand.u32 %v838, 4294901760
        %v976 = vsub.f32 %v838, %v975
        %v977 = vand.u32 %v976, 4294901760
        %v978 = vsub.f32 %v976, %v977
        %v979 = vand.u32 %v978, 4294901760
        %980 = vmatpush.msra.mxu0 %v979
        %v981 = vand.u32 %v837, 4294901760
        %v982 = vsub.f32 %v837, %v981
        %v983 = vand.u32 %v982, 4294901760
        %v984 = vsub.f32 %v982, %v983
        %v985 = vand.u32 %v984, 4294901760
        %986 = vmatpush.msra.mxu0 %v985
        %v987 = vand.u32 %v836, 4294901760
        %v988 = vsub.f32 %v836, %v987
        %v989 = vand.u32 %v988, 4294901760
        %v990 = vsub.f32 %v988, %v989
        %v991 = vand.u32 %v990, 4294901760
        %992 = vmatpush.msra.mxu0 %v991
        %v993 = vand.u32 %v835, 4294901760
        %v994 = vsub.f32 %v835, %v993
        %v995 = vand.u32 %v994, 4294901760
        %v996 = vsub.f32 %v994, %v995
        %v997 = vand.u32 %v996, 4294901760
        %998 = vmatpush.msra.mxu0 %v997
        %v999 = vand.u32 %v834, 4294901760
        %v1000 = vsub.f32 %v834, %v999
        %v1001 = vand.u32 %v1000, 4294901760
        %v1002 = vsub.f32 %v1000, %v1001
        %v1003 = vand.u32 %v1002, 4294901760
        %1004 = vmatpush.msra.mxu0 %v1003
        %v1005 = vand.u32 %v833, 4294901760
        %v1006 = vsub.f32 %v833, %v1005
        %v1007 = vand.u32 %v1006, 4294901760
        %v1008 = vsub.f32 %v1006, %v1007
        %v1009 = vand.u32 %v1008, 4294901760
        %1010 = vmatpush.msra.mxu0 %v1009
        %v1011 = vand.u32 %v832, 4294901760
        %v1012 = vsub.f32 %v832, %v1011
        %v1013 = vand.u32 %v1012, 4294901760
        %v1014 = vsub.f32 %v1012, %v1013
        %v1015 = vand.u32 %v1014, 4294901760
        %1016 = vmatpush.msra.mxu0 %v1015
        %v1017 = vand.u32 %v831, 4294901760
        %v1018 = vsub.f32 %v831, %v1017
        %v1019 = vand.u32 %v1018, 4294901760
        %v1020 = vsub.f32 %v1018, %v1019
        %v1021 = vand.u32 %v1020, 4294901760
        %1022 = vmatpush.msra.mxu0 %v1021
        %v1023 = vand.u32 %v830, 4294901760
        %v1024 = vsub.f32 %v830, %v1023
        %v1025 = vand.u32 %v1024, 4294901760
        %v1026 = vsub.f32 %v1024, %v1025
        %v1027 = vand.u32 %v1026, 4294901760
        %1028 = vmatpush.msra.mxu0 %v1027
        %v1029 = vand.u32 %v829, 4294901760
        %v1030 = vsub.f32 %v829, %v1029
        %v1031 = vand.u32 %v1030, 4294901760
        %v1032 = vsub.f32 %v1030, %v1031
        %v1033 = vand.u32 %v1032, 4294901760
        %1034 = vmatpush.msra.mxu0 %v1033
        %v1035 = vand.u32 %v828, 4294901760
        %v1036 = vsub.f32 %v828, %v1035
        %v1037 = vand.u32 %v1036, 4294901760
        %v1038 = vsub.f32 %v1036, %v1037
        %v1039 = vand.u32 %v1038, 4294901760
        %1040 = vmatpush.msra.mxu0 %v1039
        %v1041 = vand.u32 %v827, 4294901760
        %v1042 = vsub.f32 %v827, %v1041
        %v1043 = vand.u32 %v1042, 4294901760
        %v1044 = vsub.f32 %v1042, %v1043
        %v1045 = vand.u32 %v1044, 4294901760
        %1046 = vmatpush.msra.mxu0 %v1045
        %v1047 = vand.u32 %v826, 4294901760
        %v1048 = vsub.f32 %v826, %v1047
        %v1049 = vand.u32 %v1048, 4294901760
        %v1050 = vsub.f32 %v1048, %v1049
        %v1051 = vand.u32 %v1050, 4294901760
        %1052 = vmatpush.msra.mxu0 %v1051
        %v1053 = vand.u32 %v825, 4294901760
        %v1054 = vsub.f32 %v825, %v1053
        %v1055 = vand.u32 %v1054, 4294901760
        %v1056 = vsub.f32 %v1054, %v1055
        %v1057 = vand.u32 %v1056, 4294901760
        %1058 = vmatpush.msra.mxu0 %v1057
        %v1059 = vand.u32 %v824, 4294901760
        %v1060 = vsub.f32 %v824, %v1059
        %v1061 = vand.u32 %v1060, 4294901760
        %v1062 = vsub.f32 %v1060, %v1061
        %v1063 = vand.u32 %v1062, 4294901760
        %1064 = vmatpush.msra.mxu0 %v1063
        %v1065 = vand.u32 %v823, 4294901760
        %v1066 = vsub.f32 %v823, %v1065
        %v1067 = vand.u32 %v1066, 4294901760
        %v1068 = vsub.f32 %v1066, %v1067
        %v1069 = vand.u32 %v1068, 4294901760
        %1070 = vmatpush.msra.mxu0 %v1069
        %v1071 = vand.u32 %v884, 4294901760
        %1072 = vmatmul.f32.gmra.mxu0 %v1071
        %v1073 = vpop.f32.mrf.mxu0
        %v1074 = vadd.f32 %v949, %v1073
        %v1075 = vand.u32 %v891, 4294901760
        %1076 = vmatmul.f32.gmra.mxu0 %v1075
        %v1077 = vpop.f32.mrf.mxu0
        %v1078 = vadd.f32 %v957, %v1077
        %v1079 = vand.u32 %v898, 4294901760
        %1080 = vmatmul.f32.gmra.mxu0 %v1079
        %v1081 = vpop.f32.mrf.mxu0
        %v1082 = vadd.f32 %v965, %v1081
        %v1083 = vand.u32 %v905, 4294901760
        %1084 = vmatmul.f32.gmra.mxu0 %v1083
        %v1085 = vpop.f32.mrf.mxu0
        %v1086 = vadd.f32 %v973, %v1085
        %1087 = vdwg.mxu0
        %v1088 = vand.u32 %v838, 4294901760
        %v1089 = vsub.f32 %v838, %v1088
        %1090 = vmatpush.msra.mxu0 %v1089
        %v1091 = vand.u32 %v837, 4294901760
        %v1092 = vsub.f32 %v837, %v1091
        %1093 = vmatpush.msra.mxu0 %v1092
        %v1094 = vand.u32 %v836, 4294901760
        %v1095 = vsub.f32 %v836, %v1094
        %1096 = vmatpush.msra.mxu0 %v1095
        %v1097 = vand.u32 %v835, 4294901760
        %v1098 = vsub.f32 %v835, %v1097
        %1099 = vmatpush.msra.mxu0 %v1098
        %v1100 = vand.u32 %v834, 4294901760
        %v1101 = vsub.f32 %v834, %v1100
        %1102 = vmatpush.msra.mxu0 %v1101
        %v1103 = vand.u32 %v833, 4294901760
        %v1104 = vsub.f32 %v833, %v1103
        %1105 = vmatpush.msra.mxu0 %v1104
        %v1106 = vand.u32 %v832, 4294901760
        %v1107 = vsub.f32 %v832, %v1106
        %1108 = vmatpush.msra.mxu0 %v1107
        %v1109 = vand.u32 %v831, 4294901760
        %v1110 = vsub.f32 %v831, %v1109
        %1111 = vmatpush.msra.mxu0 %v1110
        %v1112 = vand.u32 %v830, 4294901760
        %v1113 = vsub.f32 %v830, %v1112
        %1114 = vmatpush.msra.mxu0 %v1113
        %v1115 = vand.u32 %v829, 4294901760
        %v1116 = vsub.f32 %v829, %v1115
        %1117 = vmatpush.msra.mxu0 %v1116
        %v1118 = vand.u32 %v828, 4294901760
        %v1119 = vsub.f32 %v828, %v1118
        %1120 = vmatpush.msra.mxu0 %v1119
        %v1121 = vand.u32 %v827, 4294901760
        %v1122 = vsub.f32 %v827, %v1121
        %1123 = vmatpush.msra.mxu0 %v1122
        %v1124 = vand.u32 %v826, 4294901760
        %v1125 = vsub.f32 %v826, %v1124
        %1126 = vmatpush.msra.mxu0 %v1125
        %v1127 = vand.u32 %v825, 4294901760
        %v1128 = vsub.f32 %v825, %v1127
        %1129 = vmatpush.msra.mxu0 %v1128
        %v1130 = vand.u32 %v824, 4294901760
        %v1131 = vsub.f32 %v824, %v1130
        %1132 = vmatpush.msra.mxu0 %v1131
        %v1133 = vand.u32 %v823, 4294901760
        %v1134 = vsub.f32 %v823, %v1133
        %1135 = vmatpush.msra.mxu0 %v1134
        %v1136 = vand.u32 %v884, 4294901760
        %v1137 = vsub.f32 %v884, %v1136
        %1138 = vmatmul.f32.gmra.mxu0 %v1137
        %v1139 = vpop.f32.mrf.mxu0
        %v1140 = vadd.f32 %v1074, %v1139
        %v1141 = vand.u32 %v891, 4294901760
        %v1142 = vsub.f32 %v891, %v1141
        %1143 = vmatmul.f32.gmra.mxu0 %v1142
        %v1144 = vpop.f32.mrf.mxu0
        %v1145 = vadd.f32 %v1078, %v1144
        %v1146 = vand.u32 %v898, 4294901760
        %v1147 = vsub.f32 %v898, %v1146
        %1148 = vmatmul.f32.gmra.mxu0 %v1147
        %v1149 = vpop.f32.mrf.mxu0
        %v1150 = vadd.f32 %v1082, %v1149
        %v1151 = vand.u32 %v905, 4294901760
        %v1152 = vsub.f32 %v905, %v1151
        %1153 = vmatmul.f32.gmra.mxu0 %v1152
        %v1154 = vpop.f32.mrf.mxu0
        %v1155 = vadd.f32 %v1086, %v1154
        %1156 = vdwg.mxu0
        %v1157 = vand.u32 %v838, 4294901760
        %1158 = vmatpush.msra.mxu0 %v1157
        %v1159 = vand.u32 %v837, 4294901760
        %1160 = vmatpush.msra.mxu0 %v1159
        %v1161 = vand.u32 %v836, 4294901760
        %1162 = vmatpush.msra.mxu0 %v1161
        %v1163 = vand.u32 %v835, 4294901760
        %1164 = vmatpush.msra.mxu0 %v1163
        %v1165 = vand.u32 %v834, 4294901760
        %1166 = vmatpush.msra.mxu0 %v1165
        %v1167 = vand.u32 %v833, 4294901760
        %1168 = vmatpush.msra.mxu0 %v1167
        %v1169 = vand.u32 %v832, 4294901760
        %1170 = vmatpush.msra.mxu0 %v1169
        %v1171 = vand.u32 %v831, 4294901760
        %1172 = vmatpush.msra.mxu0 %v1171
        %v1173 = vand.u32 %v830, 4294901760
        %1174 = vmatpush.msra.mxu0 %v1173
        %v1175 = vand.u32 %v829, 4294901760
        %1176 = vmatpush.msra.mxu0 %v1175
        %v1177 = vand.u32 %v828, 4294901760
        %1178 = vmatpush.msra.mxu0 %v1177
        %v1179 = vand.u32 %v827, 4294901760
        %1180 = vmatpush.msra.mxu0 %v1179
        %v1181 = vand.u32 %v826, 4294901760
        %1182 = vmatpush.msra.mxu0 %v1181
        %v1183 = vand.u32 %v825, 4294901760
        %1184 = vmatpush.msra.mxu0 %v1183
        %v1185 = vand.u32 %v824, 4294901760
        %1186 = vmatpush.msra.mxu0 %v1185
        %v1187 = vand.u32 %v823, 4294901760
        %1188 = vmatpush.msra.mxu0 %v1187
        %v1189 = vand.u32 %v884, 4294901760
        %v1190 = vsub.f32 %v884, %v1189
        %v1191 = vand.u32 %v1190, 4294901760
        %1192 = vmatmul.f32.gmra.mxu0 %v1191
        %v1193 = vpop.f32.mrf.mxu0
        %v1194 = vadd.f32 %v1140, %v1193
        %v1195 = vand.u32 %v891, 4294901760
        %v1196 = vsub.f32 %v891, %v1195
        %v1197 = vand.u32 %v1196, 4294901760
        %1198 = vmatmul.f32.gmra.mxu0 %v1197
        %v1199 = vpop.f32.mrf.mxu0
        %v1200 = vadd.f32 %v1145, %v1199
        %v1201 = vand.u32 %v898, 4294901760
        %v1202 = vsub.f32 %v898, %v1201
        %v1203 = vand.u32 %v1202, 4294901760
        %1204 = vmatmul.f32.gmra.mxu0 %v1203
        %v1205 = vpop.f32.mrf.mxu0
        %v1206 = vadd.f32 %v1150, %v1205
        %v1207 = vand.u32 %v905, 4294901760
        %v1208 = vsub.f32 %v905, %v1207
        %v1209 = vand.u32 %v1208, 4294901760
        %1210 = vmatmul.f32.gmra.mxu0 %v1209
        %v1211 = vpop.f32.mrf.mxu0
        %v1212 = vadd.f32 %v1155, %v1211
        %1213 = vdwg.mxu0
        %v1214 = vand.u32 %v838, 4294901760
        %v1215 = vsub.f32 %v838, %v1214
        %v1216 = vand.u32 %v1215, 4294901760
        %1217 = vmatpush.msra.mxu0 %v1216
        %v1218 = vand.u32 %v837, 4294901760
        %v1219 = vsub.f32 %v837, %v1218
        %v1220 = vand.u32 %v1219, 4294901760
        %1221 = vmatpush.msra.mxu0 %v1220
        %v1222 = vand.u32 %v836, 4294901760
        %v1223 = vsub.f32 %v836, %v1222
        %v1224 = vand.u32 %v1223, 4294901760
        %1225 = vmatpush.msra.mxu0 %v1224
        %v1226 = vand.u32 %v835, 4294901760
        %v1227 = vsub.f32 %v835, %v1226
        %v1228 = vand.u32 %v1227, 4294901760
        %1229 = vmatpush.msra.mxu0 %v1228
        %v1230 = vand.u32 %v834, 4294901760
        %v1231 = vsub.f32 %v834, %v1230
        %v1232 = vand.u32 %v1231, 4294901760
        %1233 = vmatpush.msra.mxu0 %v1232
        %v1234 = vand.u32 %v833, 4294901760
        %v1235 = vsub.f32 %v833, %v1234
        %v1236 = vand.u32 %v1235, 4294901760
        %1237 = vmatpush.msra.mxu0 %v1236
        %v1238 = vand.u32 %v832, 4294901760
        %v1239 = vsub.f32 %v832, %v1238
        %v1240 = vand.u32 %v1239, 4294901760
        %1241 = vmatpush.msra.mxu0 %v1240
        %v1242 = vand.u32 %v831, 4294901760
        %v1243 = vsub.f32 %v831, %v1242
        %v1244 = vand.u32 %v1243, 4294901760
        %1245 = vmatpush.msra.mxu0 %v1244
        %v1246 = vand.u32 %v830, 4294901760
        %v1247 = vsub.f32 %v830, %v1246
        %v1248 = vand.u32 %v1247, 4294901760
        %1249 = vmatpush.msra.mxu0 %v1248
        %v1250 = vand.u32 %v829, 4294901760
        %v1251 = vsub.f32 %v829, %v1250
        %v1252 = vand.u32 %v1251, 4294901760
        %1253 = vmatpush.msra.mxu0 %v1252
        %v1254 = vand.u32 %v828, 4294901760
        %v1255 = vsub.f32 %v828, %v1254
        %v1256 = vand.u32 %v1255, 4294901760
        %1257 = vmatpush.msra.mxu0 %v1256
        %v1258 = vand.u32 %v827, 4294901760
        %v1259 = vsub.f32 %v827, %v1258
        %v1260 = vand.u32 %v1259, 4294901760
        %1261 = vmatpush.msra.mxu0 %v1260
        %v1262 = vand.u32 %v826, 4294901760
        %v1263 = vsub.f32 %v826, %v1262
        %v1264 = vand.u32 %v1263, 4294901760
        %1265 = vmatpush.msra.mxu0 %v1264
        %v1266 = vand.u32 %v825, 4294901760
        %v1267 = vsub.f32 %v825, %v1266
        %v1268 = vand.u32 %v1267, 4294901760
        %1269 = vmatpush.msra.mxu0 %v1268
        %v1270 = vand.u32 %v824, 4294901760
        %v1271 = vsub.f32 %v824, %v1270
        %v1272 = vand.u32 %v1271, 4294901760
        %1273 = vmatpush.msra.mxu0 %v1272
        %v1274 = vand.u32 %v823, 4294901760
        %v1275 = vsub.f32 %v823, %v1274
        %v1276 = vand.u32 %v1275, 4294901760
        %1277 = vmatpush.msra.mxu0 %v1276
        %v1278 = vand.u32 %v884, 4294901760
        %1279 = vmatmul.f32.gmra.mxu0 %v1278
        %v1280 = vpop.f32.mrf.mxu0
        %v1281 = vadd.f32 %v1194, %v1280
        %v1282 = vand.u32 %v891, 4294901760
        %1283 = vmatmul.f32.gmra.mxu0 %v1282
        %v1284 = vpop.f32.mrf.mxu0
        %v1285 = vadd.f32 %v1200, %v1284
        %v1286 = vand.u32 %v898, 4294901760
        %1287 = vmatmul.f32.gmra.mxu0 %v1286
        %v1288 = vpop.f32.mrf.mxu0
        %v1289 = vadd.f32 %v1206, %v1288
        %v1290 = vand.u32 %v905, 4294901760
        %1291 = vmatmul.f32.gmra.mxu0 %v1290
        %v1292 = vpop.f32.mrf.mxu0
        %v1293 = vadd.f32 %v1212, %v1292
        %1294 = vdwg.mxu0
        %v1295 = vand.u32 %v838, 4294901760
        %1296 = vmatpush.msra.mxu0 %v1295
        %v1297 = vand.u32 %v837, 4294901760
        %1298 = vmatpush.msra.mxu0 %v1297
        %v1299 = vand.u32 %v836, 4294901760
        %1300 = vmatpush.msra.mxu0 %v1299
        %v1301 = vand.u32 %v835, 4294901760
        %1302 = vmatpush.msra.mxu0 %v1301
        %v1303 = vand.u32 %v834, 4294901760
        %1304 = vmatpush.msra.mxu0 %v1303
        %v1305 = vand.u32 %v833, 4294901760
        %1306 = vmatpush.msra.mxu0 %v1305
        %v1307 = vand.u32 %v832, 4294901760
        %1308 = vmatpush.msra.mxu0 %v1307
        %v1309 = vand.u32 %v831, 4294901760
        %1310 = vmatpush.msra.mxu0 %v1309
        %v1311 = vand.u32 %v830, 4294901760
        %1312 = vmatpush.msra.mxu0 %v1311
        %v1313 = vand.u32 %v829, 4294901760
        %1314 = vmatpush.msra.mxu0 %v1313
        %v1315 = vand.u32 %v828, 4294901760
        %1316 = vmatpush.msra.mxu0 %v1315
        %v1317 = vand.u32 %v827, 4294901760
        %1318 = vmatpush.msra.mxu0 %v1317
        %v1319 = vand.u32 %v826, 4294901760
        %1320 = vmatpush.msra.mxu0 %v1319
        %v1321 = vand.u32 %v825, 4294901760
        %1322 = vmatpush.msra.mxu0 %v1321
        %v1323 = vand.u32 %v824, 4294901760
        %1324 = vmatpush.msra.mxu0 %v1323
        %v1325 = vand.u32 %v823, 4294901760
        %1326 = vmatpush.msra.mxu0 %v1325
        %v1327 = vand.u32 %v884, 4294901760
        %1328 = vmatmul.f32.gmra.mxu0 %v1327
        %v1329 = vpop.f32.mrf.mxu0
        %v1330 = vadd.f32 %v1281, %v1329
        %v1331 = vand.u32 %v891, 4294901760
        %1332 = vmatmul.f32.gmra.mxu0 %v1331
        %v1333 = vpop.f32.mrf.mxu0
        %v1334 = vadd.f32 %v1285, %v1333
        %v1335 = vand.u32 %v898, 4294901760
        %1336 = vmatmul.f32.gmra.mxu0 %v1335
        %v1337 = vpop.f32.mrf.mxu0
        %v1338 = vadd.f32 %v1289, %v1337
        %v1339 = vand.u32 %v905, 4294901760
        %1340 = vmatmul.f32.gmra.mxu0 %v1339
        %v1341 = vpop.f32.mrf.mxu0
        %v1342 = vadd.f32 %v1293, %v1341
        %1343 = vdwg.mxu0
        %v1344 = vadd.f32 %v1330, 1e-30
        %v1345 = vadd.f32 %v1334, 1e-30
        %v1346 = vadd.f32 %v1338, 1e-30
        %v1347 = vadd.f32 %v1342, 1e-30
        %v1348 = vrsqrt.pop %v1344
        %v1349 = vmul.f32 %v1348, %v1344
        %v1350 = vmul.f32 %v1349, %v1348
        %v1351 = vmul.f32 0.5, %v1350
        %v1352 = vsub.f32 1.5, %v1351
        %v1353 = vmul.f32 %v1348, %v1352
        %vm1354 = vweird.f32 %v1344
        %vm1355 = vweird.f32 %v1348
        %vm1356 = vmor %vm1354, %vm1355
        %v1357 = vsel %vm1356, %v1348, %v1353
        %v1358 = vrsqrt.pop %v1345
        %v1359 = vmul.f32 %v1358, %v1345
        %v1360 = vmul.f32 %v1359, %v1358
        %v1361 = vmul.f32 0.5, %v1360
        %v1362 = vsub.f32 1.5, %v1361
        %v1363 = vmul.f32 %v1358, %v1362
        %vm1364 = vweird.f32 %v1345
        %vm1365 = vweird.f32 %v1358
        %vm1366 = vmor %vm1364, %vm1365
        %v1367 = vsel %vm1366, %v1358, %v1363
        %v1368 = vrsqrt.pop %v1346
        %v1369 = vmul.f32 %v1368, %v1346
        %v1370 = vmul.f32 %v1369, %v1368
        %v1371 = vmul.f32 0.5, %v1370
        %v1372 = vsub.f32 1.5, %v1371
        %v1373 = vmul.f32 %v1368, %v1372
        %vm1374 = vweird.f32 %v1346
        %vm1375 = vweird.f32 %v1368
        %vm1376 = vmor %vm1374, %vm1375
        %v1377 = vsel %vm1376, %v1368, %v1373
        %v1378 = vrsqrt.pop %v1347
        %v1379 = vmul.f32 %v1378, %v1347
        %v1380 = vmul.f32 %v1379, %v1378
        %v1381 = vmul.f32 0.5, %v1380
        %v1382 = vsub.f32 1.5, %v1381
        %v1383 = vmul.f32 %v1378, %v1382
        %vm1384 = vweird.f32 %v1347
        %vm1385 = vweird.f32 %v1378
        %vm1386 = vmor %vm1384, %vm1385
        %v1387 = vsel %vm1386, %v1378, %v1383
        %v1388 = vmul.f32 %v1330, %v1357
        %v1389 = vmul.f32 %v1334, %v1367
        %v1390 = vmul.f32 %v1338, %v1377
        %v1391 = vmul.f32 %v1342, %v1387
        %v1392 = vadd.f32 %v1330, 1.0
        %v1393 = vadd.f32 %v1334, 1.0
        %v1394 = vadd.f32 %v1338, 1.0
        %v1395 = vadd.f32 %v1342, 1.0
        %v1396 = vrcp.pop %v1392
        %v1397 = vrcp.pop %v1393
        %v1398 = vrcp.pop %v1394
        %v1399 = vrcp.pop %v1395
        %v1400 = vmul.f32 %v1388, %v1396
        %v1401 = vmul.f32 %v1389, %v1397
        %v1402 = vmul.f32 %v1390, %v1398
        %v1403 = vmul.f32 %v1391, %v1399
        %v1408 = vrot.slane %v1400, 1
        %v1409 = vrot.slane %v1400, 2
        %v1410 = vrot.slane %v1400, 3
        %v1411 = vrot.slane %v1400, 4
        %v1412 = vrot.slane %v1400, 5
        %v1413 = vrot.slane %v1400, 6
        %v1414 = vrot.slane %v1400, 7
        %v1415 = vrot.slane %v1401, 1
        %v1416 = vrot.slane %v1401, 2
        %v1417 = vrot.slane %v1401, 3
        %v1418 = vrot.slane %v1401, 4
        %v1419 = vrot.slane %v1401, 5
        %v1420 = vrot.slane %v1401, 6
        %v1421 = vrot.slane %v1401, 7
        %v1422 = vrot.slane %v1402, 1
        %v1423 = vrot.slane %v1402, 2
        %v1424 = vrot.slane %v1402, 3
        %v1425 = vrot.slane %v1402, 4
        %v1426 = vrot.slane %v1402, 5
        %v1427 = vrot.slane %v1402, 6
        %v1428 = vrot.slane %v1402, 7
        %v1429 = vrot.slane %v1403, 1
        %v1430 = vrot.slane %v1403, 2
        %v1431 = vrot.slane %v1403, 3
        %v1432 = vrot.slane %v1403, 4
        %v1433 = vrot.slane %v1403, 5
        %v1434 = vrot.slane %v1403, 6
        %v1435 = vrot.slane %v1403, 7
        %v1468 = vmul.f32 %v511, %v1400
        %v1469 = vmul.f32 %v520, %v1408
        %v1470 = vmul.f32 %v529, %v1409
        %v1471 = vmul.f32 %v538, %v1410
        %v1472 = vmul.f32 %v547, %v1411
        %v1473 = vmul.f32 %v556, %v1412
        %v1474 = vmul.f32 %v565, %v1413
        %v1475 = vmul.f32 %v574, %v1414
        %v1476 = vmul.f32 %v583, %v1401
        %v1477 = vmul.f32 %v592, %v1415
        %v1478 = vmul.f32 %v601, %v1416
        %v1479 = vmul.f32 %v610, %v1417
        %v1480 = vmul.f32 %v619, %v1418
        %v1481 = vmul.f32 %v628, %v1419
        %v1482 = vmul.f32 %v637, %v1420
        %v1483 = vmul.f32 %v646, %v1421
        %v1484 = vmul.f32 %v655, %v1402
        %v1485 = vmul.f32 %v664, %v1422
        %v1486 = vmul.f32 %v673, %v1423
        %v1487 = vmul.f32 %v682, %v1424
        %v1488 = vmul.f32 %v691, %v1425
        %v1489 = vmul.f32 %v700, %v1426
        %v1490 = vmul.f32 %v709, %v1427
        %v1491 = vmul.f32 %v718, %v1428
        %v1492 = vmul.f32 %v727, %v1403
        %v1493 = vmul.f32 %v736, %v1429
        %v1494 = vmul.f32 %v745, %v1430
        %v1495 = vmul.f32 %v754, %v1431
        %v1496 = vmul.f32 %v763, %v1432
        %v1497 = vmul.f32 %v772, %v1433
        %v1498 = vmul.f32 %v781, %v1434
        %v1499 = vmul.f32 %v790, %v1435
        %v1532 = vrot.slane %v1469, 7
        %v1533 = vsel %vm871, %v1532, %v1468
        %v1534 = vrot.slane %v1470, 6
        %v1535 = vsel %vm873, %v1534, %v1533
        %v1536 = vrot.slane %v1471, 5
        %v1537 = vsel %vm875, %v1536, %v1535
        %v1538 = vrot.slane %v1472, 4
        %v1539 = vsel %vm877, %v1538, %v1537
        %v1540 = vrot.slane %v1473, 3
        %v1541 = vsel %vm879, %v1540, %v1539
        %v1542 = vrot.slane %v1474, 2
        %v1543 = vsel %vm881, %v1542, %v1541
        %v1544 = vrot.slane %v1475, 1
        %v1545 = vsel %vm883, %v1544, %v1543
        %v1546 = vrot.slane %v1477, 7
        %v1547 = vsel %vm871, %v1546, %v1476
        %v1548 = vrot.slane %v1478, 6
        %v1549 = vsel %vm873, %v1548, %v1547
        %v1550 = vrot.slane %v1479, 5
        %v1551 = vsel %vm875, %v1550, %v1549
        %v1552 = vrot.slane %v1480, 4
        %v1553 = vsel %vm877, %v1552, %v1551
        %v1554 = vrot.slane %v1481, 3
        %v1555 = vsel %vm879, %v1554, %v1553
        %v1556 = vrot.slane %v1482, 2
        %v1557 = vsel %vm881, %v1556, %v1555
        %v1558 = vrot.slane %v1483, 1
        %v1559 = vsel %vm883, %v1558, %v1557
        %v1560 = vrot.slane %v1485, 7
        %v1561 = vsel %vm871, %v1560, %v1484
        %v1562 = vrot.slane %v1486, 6
        %v1563 = vsel %vm873, %v1562, %v1561
        %v1564 = vrot.slane %v1487, 5
        %v1565 = vsel %vm875, %v1564, %v1563
        %v1566 = vrot.slane %v1488, 4
        %v1567 = vsel %vm877, %v1566, %v1565
        %v1568 = vrot.slane %v1489, 3
        %v1569 = vsel %vm879, %v1568, %v1567
        %v1570 = vrot.slane %v1490, 2
        %v1571 = vsel %vm881, %v1570, %v1569
        %v1572 = vrot.slane %v1491, 1
        %v1573 = vsel %vm883, %v1572, %v1571
        %v1574 = vrot.slane %v1493, 7
        %v1575 = vsel %vm871, %v1574, %v1492
        %v1576 = vrot.slane %v1494, 6
        %v1577 = vsel %vm873, %v1576, %v1575
        %v1578 = vrot.slane %v1495, 5
        %v1579 = vsel %vm875, %v1578, %v1577
        %v1580 = vrot.slane %v1496, 4
        %v1581 = vsel %vm877, %v1580, %v1579
        %v1582 = vrot.slane %v1497, 3
        %v1583 = vsel %vm879, %v1582, %v1581
        %v1584 = vrot.slane %v1498, 2
        %v1585 = vsel %vm881, %v1584, %v1583
        %v1586 = vrot.slane %v1499, 1
        %v1587 = vsel %vm883, %v1586, %v1585
        %1592 = vst [vmem:[%s231] sm:$0xff] %v1545
        %1593 = vst [vmem:[%s231 + $0x8] sm:$0xff] %v1559
        %1594 = vst [vmem:[%s231 + $0x10] sm:$0xff] %v1573
        %1595 = vst [vmem:[%s231 + $0x18] sm:$0xff] %v1587
        %s1596 = sand.u32 %s95, 1
        %s1597 = scalar_lea.sflag [#allocation4], %s1596
        %s1598 = sand.u32 %s95, 1
        %s1599 = smul.addr %s1598, 32
        %s1600 = scalar_lea.vmem [#allocation8], %s1599
        // Predicated region
        $region45: #{tpu_custom_call.1} parent=31 // pred_check
          %p1601 = pneg %p105
        $region46: #{tpu_custom_call.1} parent=31 // pred_check_branch
          %1603 = sbr.rel (%p1601) target = $region48
        $region47: #{tpu_custom_call.1} parent=31 // pred_region
          %s1604 = smul.u32 4, %s19
          %s1605 = ssub.s32 5, %s1604
          %p1606 = scmp.lt.s32.totalorder %s1605, 4
          %s1607 = scalar_select %p1606, %s1605, 4
          %s1608 = smul.u32 8, %s1607
          %s1609 = ssub.s32 32, %s1608
          %s1610 = sshll.u32 %s1609, 4
          %1611 = vsyncadd %s1597, %s1610
          %p1612 = scmp.ne.s32.totalorder 0, %s1608
          %s1613 = smul.addr %s1604, 8
          %s1614 = scalar_lea.hbm %s3, %s1613
          %s1615 = smul.u32 8, %s1607
          %s1616 = sshll.u32 %s1600, 4
          %s1617 = int_to_ptr.vmem [resolvable:$true] %s1616
          %s1618 = sshll.u32 %s1614, 4
          %s1619 = int_to_ptr.hbm [resolvable:$true] %s1618
          %s1620 = sshll.u32 %s1615, 4
          %1624 = dma.vmem_to_hbm [thread:$0]  (%p1612), %s1617, %s1620, %s1619, %s1597, 128, 128, 8
        $region48: #{tpu_custom_call.1} parent=31 // pred_fallthru
          _
      $region32: #{tpu_custom_call.1} parent=5 // pred_fallthru
        _
      %p1625 = scmp.le.s32.totalorder 2, %s14
      // Predicated region
      $region49: #{tpu_custom_call.1} parent=5 // pred_check
        %p1626 = pneg %p1625
      $region50: #{tpu_custom_call.1} parent=5 // pred_check_branch
        %1628 = sbr.rel (%p1626) target = $region52
      $region51: #{tpu_custom_call.1} parent=5 // pred_region
        %s1629 = ssub.s32 %s14, 2
        // Predicated region
        $region53: #{tpu_custom_call.1} parent=51 // pred_check
          %p1630 = pneg %p111
        $region54: #{tpu_custom_call.1} parent=51 // pred_check_branch
          %1632 = sbr.rel (%p1630) target = $region56
        $region55: #{tpu_custom_call.1} parent=51 // pred_region
          %s1633 = sand.u32 %s96, 1
          %s1634 = scalar_lea.sflag [#allocation4], %s1633
          %s1635 = sand.u32 %s96, 1
          %s1636 = smul.addr %s1635, 32
          %s1637 = scalar_lea.vmem [#allocation8], %s1636
          %1639 = dma.done %s1634, 512
        $region56: #{tpu_custom_call.1} parent=51 // pred_fallthru
          _
      $region52: #{tpu_custom_call.1} parent=5 // pred_fallthru
        _
    $region6: #{tpu_custom_call.1} parent=1 // loop_footer
      %s18 = sadd.s32 1, %s14
    $region7: #{tpu_custom_call.1} parent=1 // loop_footer_branch
      %13 = sbr.rel target = $region3
    $region8: #{tpu_custom_call.1} parent=1 // loop_exit
      _
    %1640 = vsyncpa [#allocation3], 1
    %s1641 = scalar_lea.sflag [#allocation3], 1
    %1642 = vsyncpa %s1641, 1
    %1643 = vsyncpa [#allocation6], 1
    %1644 = vsyncpa [#allocation4], 1
    %s1645 = scalar_lea.sflag [#allocation4], 1
    %1646 = vsyncpa %s1645, 1

</llo_original>
